<compile_context>
chip_gen: v7x
topology: tpu7x:2x2x1
jax: 0.10.0
libtpu: 0.0.40
codegen_flags: <defaults>
</compile_context>

<pallas_src>
from functools import partial

import jax
import jax.numpy as jnp
import numpy as np
from jax.experimental import pallas as pl
from jax.experimental.pallas import tpu as pltpu

EPS = float(jnp.finfo(jnp.float32).eps)   # torch.finfo(torch.float32).eps
ALPHA = 1000.0

_LANE = 128
_MAX_TILE_T = 1024        # cap on 128-multiple time tiles (bounds in-kernel unroll)
_MAX_TILE_B = 4
_MAX_UNROLL = 16          # tile_b * n_chunks chunk bodies per row group
_MIN_N_TILES = 2          # >= 2 neuron tiles so v7x megacore can shard axis 0
_UNROLL_GROUPS = 8        # unroll the row-group loop when it is this short


def _vmem_budgets():
    """(per-step tile budget, vmem_limit_bytes), derived from the chip's VMEM."""
    cap = None
    try:
        info = pltpu.get_tpu_info()
        cap = int(getattr(info, "vmem_capacity_bytes", 0)) or None
    except Exception:
        cap = None
    if cap is None:
        cap = 64 * 1024 * 1024            # conservative: v7x per-core VMEM
    limit = min((cap * 3) // 4, 96 * 1024 * 1024)   # 48 MiB on v7x, 96 MiB v5e/v6e
    return limit // 2, limit


def _largest_divisor(dim, unit, cap):
    """Largest multiple of `unit` that divides `dim` and is <= cap, else None."""
    hi = min(cap, dim)
    hi -= hi % unit
    for c in range(hi, 0, -unit):
        if dim % c == 0:
            return c
    return None


def _loss_kernel(yt_ref, yp_ref, out_ref,
                 s_dt, s_dp, s_dtt, s_dpp, s_dtp, s_tlp,
                 sh_t_ref, sh_p_ref,
                 *, n_samples, eps, alpha, chunk_w, group):
    """Grid = (n_tiles, b_blocks, t_blocks); axes 1, 2 form the reduction.

    yt_ref / yp_ref : (tile_b, tile_n, tile_t) input tiles.
    out_ref         : (tile_n, 1) per-neuron loss, written on the last step.
    s_*             : (tile_n, chunk_w) f32 lane-folded running sums.
    sh_*_ref        : (tile_n, chunk_w) lane-dense per-neuron numerical shifts.
    """
    bi, ti = pl.program_id(1), pl.program_id(2)
    nb, nt = pl.num_programs(1), pl.num_programs(2)
    is_first = (bi == 0) & (ti == 0)
    is_last = (bi == nb - 1) & (ti == nt - 1)

    tile_b, tile_n, tile_t = yt_ref.shape
    n_chunks = tile_t // chunk_w
    n_groups = tile_n // group

    @pl.when(is_first)
    def _():
        zeros = jnp.zeros_like(s_dt)
        s_dt[...] = zeros
        s_dp[...] = zeros
        s_dtt[...] = zeros
        s_dpp[...] = zeros
        s_dtp[...] = zeros
        s_tlp[...] = zeros
        # Per-neuron numerical shift = first-tile mean (keeps the shifted-moment
        # algebra exact while avoiding cancellation in sum_xx - S*mean^2).
        yt0 = yt_ref[0].astype(jnp.float32)          # (tile_n, tile_t)
        yp0 = yp_ref[0].astype(jnp.float32)
        inv = jnp.float32(1.0 / tile_t)
        m_t = jnp.sum(yt0, axis=-1, keepdims=True) * inv
        m_p = jnp.sum(yp0, axis=-1, keepdims=True) * inv
        # Stored lane-dense so the hot-loop subtract uses plain vreg operands.
        sh_t_ref[...] = jnp.broadcast_to(m_t, (tile_n, chunk_w))
        sh_p_ref[...] = jnp.broadcast_to(m_p, (tile_n, chunk_w))

    def do_group(r0):
        rows = pl.ds(r0, group)
        sh_t = sh_t_ref[rows, :]                     # (group, chunk_w)
        sh_p = sh_p_ref[rows, :]
        a_dt = jnp.zeros((group, chunk_w), jnp.float32)
        a_dp = a_dt
        a_dtt = a_dt
        a_dpp = a_dt
        a_dtp = a_dt
        a_tlp = a_dt
        # Fold (batch, time-chunk) contributions in registers; a single scratch
        # read-modify-write per quantity per group per grid step.
        for bb in range(tile_b):
            for c in range(n_chunks):
                csl = pl.ds(c * chunk_w, chunk_w)
                yt_c = yt_ref[bb, rows, csl].astype(jnp.float32)
                yp_c = yp_ref[bb, rows, csl].astype(jnp.float32)
                dt = yt_c - sh_t
                dp = yp_c - sh_p
                a_dt = a_dt + dt
                a_dp = a_dp + dp
                a_dtt = a_dtt + dt * dt
                a_dpp = a_dpp + dp * dp
                a_dtp = a_dtp + dt * dp
                # Poisson: only (y_true+eps)*log(y_pred+eps) is accumulated;
                # the sum(y_pred+eps) half is rebuilt at finalize from s_dp.
                a_tlp = a_tlp + (yt_c + eps) * jnp.log(yp_c + eps)
        s_dt[rows, :] += a_dt
        s_dp[rows, :] += a_dp
        s_dtt[rows, :] += a_dtt
        s_dpp[rows, :] += a_dpp
        s_dtp[rows, :] += a_dtp
        s_tlp[rows, :] += a_tlp

    if n_groups <= _UNROLL_GROUPS:
        for g in range(n_groups):
            do_group(g * group)
    else:
        @pl.loop(0, n_groups)
        def _(g):
            do_group(pl.multiple_of(g * group, group))

    @pl.when(is_last)
    def _():
        s = jnp.float32(n_samples)
        sum_dt = jnp.sum(s_dt[...], axis=-1, keepdims=True)     # (tile_n, 1)
        sum_dp = jnp.sum(s_dp[...], axis=-1, keepdims=True)
        sum_dtt = jnp.sum(s_dtt[...], axis=-1, keepdims=True)
        sum_dpp = jnp.sum(s_dpp[...], axis=-1, keepdims=True)
        sum_dtp = jnp.sum(s_dtp[...], axis=-1, keepdims=True)
        sum_tlp = jnp.sum(s_tlp[...], axis=-1, keepdims=True)
        shift_p = sh_p_ref[:, :1]                                # (tile_n, 1)

        # poisson = sum(y_pred + eps) - sum((y_true+eps) * log(y_pred+eps))
        pois_n = (sum_dp + s * (shift_p + eps)) - sum_tlp

        mean_dt = sum_dt / s
        mean_dp = sum_dp / s
        ss_t = jnp.maximum(sum_dtt - s * mean_dt * mean_dt, 0.0)
        ss_p = jnp.maximum(sum_dpp - s * mean_dp * mean_dp, 0.0)
        std_t = jnp.sqrt(ss_t / (s - 1.0))        # torch.std default: ddof=1
        std_p = jnp.sqrt(ss_p / (s - 1.0))
        cov = (sum_dtp - s * mean_dt * mean_dp) / s   # biased cov (mean of products)
        corr = cov / ((std_t + eps) * (std_p + eps))
        # 2 - (corr + 1) == 1 - corr ; emit per-neuron total contribution
        out_ref[...] = pois_n + alpha * (1.0 - corr)


def poisson_correlation_loss(y_true, y_pred, *, ds_size, batch_size,
                             ds_scale=True, eps=EPS, alpha=ALPHA,
                             tile_n=None, tile_t=None, tile_b=None):
    """y_true, y_pred: (b, n, t), any float dtype (bf16 fine; cast in-kernel)."""
    assert y_true.shape == y_pred.shape and y_true.ndim == 3
    b, n, t = y_true.shape
    itemsize = jnp.dtype(y_true.dtype).itemsize
    sub_unit = {4: 8, 2: 16, 1: 32}.get(itemsize, 8)

    budget, vmem_limit = _vmem_budgets()

    def chunk_of(tt):
        return _LANE if tt % _LANE == 0 else tt

    def per_row_bytes(tt, tb):
        # 2 inputs x 2 pipeline buffers x tb batch slices + 8 lane-folded f32
        # scratch rows (6 accumulators + 2 shifts).
        return tb * tt * 2 * 2 * itemsize + 8 * chunk_of(tt) * 4

    # Time tile: full rows whenever legal (HBM-contiguous DMA), otherwise the
    # largest 128-multiple divisor (capped to bound in-kernel unrolling).
    # TODO(synk): very long, non-128-divisible t would want masked remainder chunks.
    if tile_t is None:
        if t % _LANE != 0:
            tile_t = t          # full-extent block is always legal
        else:
            tile_t = _largest_divisor(t, _LANE, min(t, _MAX_TILE_T)) or t
    assert t % tile_t == 0, "tile_t must divide t"
    chunk_w = chunk_of(tile_t)

    # Fold small batches into the block to amortize per-grid-step overhead.
    if tile_b is None:
        tile_b = 1
        for cand in range(min(b, _MAX_TILE_B), 1, -1):
            if (b % cand == 0
                    and per_row_bytes(tile_t, cand) * sub_unit <= budget
                    and cand * (tile_t // chunk_w) <= _MAX_UNROLL):
                tile_b = cand
                break
    assert b % tile_b == 0, "tile_b must divide b"

    # Neuron tile: as large as the VMEM budget allows, but keep >= _MIN_N_TILES
    # tiles so the "parallel" grid axis can shard across v7x TensorCores.
    if tile_n is None:
        cap_rows = max(sub_unit, budget // per_row_bytes(tile_t, tile_b))
        cap_par = max(sub_unit, -(-n // _MIN_N_TILES))
        cap = max(sub_unit, min(cap_rows, cap_par))
        cap -= cap % sub_unit
        cap = max(cap, sub_unit)
        tile_n = _largest_divisor(n, sub_unit, cap) or cap
    group = sub_unit if tile_n % sub_unit == 0 else tile_n

    # Pad neurons so tile_n divides n; padded (all-zero) neurons produce finite
    # values and are sliced away below.
    n_pad = -(-n // tile_n) * tile_n
    if n_pad != n:
        pad = ((0, 0), (0, n_pad - n), (0, 0))
        y_true = jnp.pad(y_true, pad)
        y_pred = jnp.pad(y_pred, pad)

    grid = (n_pad // tile_n, b // tile_b, t // tile_t)
    kernel = partial(_loss_kernel, n_samples=b * t, eps=eps, alpha=alpha,
                     chunk_w=chunk_w, group=group)

    cost = pl.CostEstimate(
        flops=14 * b * n_pad * t,
        transcendentals=b * n_pad * t,
        bytes_accessed=2 * b * n_pad * t * itemsize + n_pad * 4,
    )

    per_neuron = pl.pallas_call(
        kernel,
        out_shape=jax.ShapeDtypeStruct((n_pad, 1), jnp.float32),
        grid_spec=pltpu.PrefetchScalarGridSpec(
            num_scalar_prefetch=0,
            grid=grid,
            in_specs=[
                pl.BlockSpec((tile_b, tile_n, tile_t),
                             lambda ni, bi, ti: (bi, ni, ti)),
                pl.BlockSpec((tile_b, tile_n, tile_t),
                             lambda ni, bi, ti: (bi, ni, ti)),
            ],
            out_specs=pl.BlockSpec((tile_n, 1), lambda ni, bi, ti: (ni, 0)),
            scratch_shapes=(
                [pltpu.VMEM((tile_n, chunk_w), jnp.float32) for _ in range(6)]
                + [pltpu.VMEM((tile_n, chunk_w), jnp.float32) for _ in range(2)]
            ),
        ),
        compiler_params=pltpu.CompilerParams(
            dimension_semantics=("parallel", "arbitrary", "arbitrary"),
            vmem_limit_bytes=vmem_limit,
        ),
        cost_estimate=cost,
    )(y_true, y_pred)

    loss = jnp.sum(per_neuron[:n, 0])
    if ds_scale:                                     # Criterion.scale_ds
        loss = loss * jnp.sqrt(jnp.float32(ds_size) / jnp.float32(batch_size))
    return loss


def _reference_loss(y_true, y_pred, *, ds_size, batch_size, ds_scale=True,
                    eps=EPS, alpha=ALPHA):
    """Pure-JAX reference mirroring the PyTorch module exactly."""
    yt_e = y_true.astype(jnp.float32) + eps
    yp_e = y_pred.astype(jnp.float32) + eps
    poisson = jnp.sum(yp_e - yt_e * jnp.log(yp_e))

    b, n, t = y_true.shape
    yt = jnp.transpose(y_true.astype(jnp.float32), (0, 2, 1)).reshape(b * t, n)
    yp = jnp.transpose(y_pred.astype(jnp.float32), (0, 2, 1)).reshape(b * t, n)
    yt_n = (yt - yt.mean(axis=0, keepdims=True)) / (
        yt.std(axis=0, keepdims=True, ddof=1) + eps
    )
    yp_n = (yp - yp.mean(axis=0, keepdims=True)) / (
        yp.std(axis=0, keepdims=True, ddof=1) + eps
    )
    corr = (yt_n * yp_n).mean(axis=0)
    corr_loss = jnp.sum(2.0 - (corr + 1.0))

    loss = poisson + alpha * corr_loss
    if ds_scale:
        loss = loss * jnp.sqrt(jnp.float32(ds_size) / jnp.float32(batch_size))
    return loss


if __name__ == "__main__":
    key = jax.random.PRNGKey(0)
    k1, k2, k3, k4 = jax.random.split(key, 4)

    # neural responses / predictions are non-negative rates, (batch, neurons, time)
    cases = []

    b, n, t = 2, 256, 256
    yt = jax.random.uniform(k1, (b, n, t), jnp.float32, 0.0, 2.0)
    yp = jax.random.uniform(k2, (b, n, t), jnp.float32, 0.01, 2.0)
    cases.append((yt, yp, dict(tile_n=128, tile_t=128)))   # explicit tiles
    cases.append((yt, yp, dict()))                          # auto-sized tiles

    # t not a multiple of 128 -> full-extent time blocks
    b2, n2, t2 = 2, 64, 48
    yt2 = jax.random.uniform(k3, (b2, n2, t2), jnp.float32, 0.0, 2.0)
    yp2 = jax.random.uniform(k4, (b2, n2, t2), jnp.float32, 0.01, 2.0)
    cases.append((yt2, yp2, dict()))

    # n with no clean tile divisor -> padded neuron axis
    cases.append((yt2[:, :60], yp2[:, :60], dict()))

    # deterministic "dataset size" buffer (BufferDict in the PyTorch module)
    ds_size = 144.0

    for yt_i, yp_i, tiles in cases:
        bs = yt_i.shape[0]
        loss = poisson_correlation_loss(
            yt_i, yp_i, ds_size=ds_size, batch_size=bs, ds_scale=True, **tiles
        )
        loss = jax.block_until_ready(loss)
        ref = _reference_loss(
            yt_i, yp_i, ds_size=ds_size, batch_size=bs, ds_scale=True
        )
        np.testing.assert_allclose(np.asarray(loss), np.asarray(ref),
                                   rtol=5e-4, atol=1e-2)

    print("KERNEL_OK")
</pallas_src>

<mosaic_0001>
module attributes {stable_mosaic.version = 11 : i64} {
  func.func @_loss_kernel(%arg0: i32, %arg1: i32, %arg2: i32, %arg3: memref<2x128x128xf32, #tpu.memory_space<vmem>>, %arg4: memref<2x128x128xf32, #tpu.memory_space<vmem>>, %arg5: memref<128x1xf32, #tpu.memory_space<vmem>>, %arg6: memref<128x128xf32, #tpu.memory_space<vmem>>, %arg7: memref<128x128xf32, #tpu.memory_space<vmem>>, %arg8: memref<128x128xf32, #tpu.memory_space<vmem>>, %arg9: memref<128x128xf32, #tpu.memory_space<vmem>>, %arg10: memref<128x128xf32, #tpu.memory_space<vmem>>, %arg11: memref<128x128xf32, #tpu.memory_space<vmem>>, %arg12: memref<128x128xf32, #tpu.memory_space<vmem>>, %arg13: memref<128x128xf32, #tpu.memory_space<vmem>>) attributes {dimension_semantics = [#tpu.dimension_semantics<parallel>, #tpu.dimension_semantics<arbitrary>, #tpu.dimension_semantics<arbitrary>], iteration_bounds = array<i64: 2, 1, 2>, scalar_prefetch = 0 : i64, scratch_operands = 8 : i64, tpu.core_type = #tpu.core_type<tc>, window_params = [{transform_indices = @transform_0, window_bounds = array<i64: 2, 128, 128>}, {transform_indices = @transform_1, window_bounds = array<i64: 2, 128, 128>}, {transform_indices = @transform_2, window_bounds = array<i64: 128, 1>}]} {
    %c0_i32 = arith.constant 0 : i32
    %0 = arith.cmpi eq, %arg1, %c0_i32 : i32
    %c0_i32_0 = arith.constant 0 : i32
    %1 = arith.cmpi eq, %arg2, %c0_i32_0 : i32
    %2 = arith.andi %0, %1 : i1
    %c0_i32_1 = arith.constant 0 : i32
    %3 = arith.cmpi eq, %arg1, %c0_i32_1 : i32
    %c1_i32 = arith.constant 1 : i32
    %4 = arith.cmpi eq, %arg2, %c1_i32 : i32
    %5 = arith.andi %3, %4 : i1
    %6 = arith.extui %2 : i1 to i32
    %c0_i32_2 = arith.constant 0 : i32
    %7 = arith.cmpi ne, %6, %c0_i32_2 : i32
    scf.if %7 {
      %cst = arith.constant 0.000000e+00 : f32
      %11 = vector.broadcast %cst : f32 to vector<128x128xf32>
      %c0 = arith.constant 0 : index
      %c0_7 = arith.constant 0 : index
      %12 = vector.load %arg6[%c0, %c0_7] : memref<128x128xf32, #tpu.memory_space<vmem>>, vector<128x128xf32>
      tpu.vector_store %arg6[%c0, %c0_7], %11 {strides = array<i32>} : memref<128x128xf32, #tpu.memory_space<vmem>>, vector<128x128xf32>,
      %c0_8 = arith.constant 0 : index
      %c0_9 = arith.constant 0 : index
      %13 = vector.load %arg7[%c0_8, %c0_9] : memref<128x128xf32, #tpu.memory_space<vmem>>, vector<128x128xf32>
      tpu.vector_store %arg7[%c0_8, %c0_9], %11 {strides = array<i32>} : memref<128x128xf32, #tpu.memory_space<vmem>>, vector<128x128xf32>,
      %c0_10 = arith.constant 0 : index
      %c0_11 = arith.constant 0 : index
      %14 = vector.load %arg8[%c0_10, %c0_11] : memref<128x128xf32, #tpu.memory_space<vmem>>, vector<128x128xf32>
      tpu.vector_store %arg8[%c0_10, %c0_11], %11 {strides = array<i32>} : memref<128x128xf32, #tpu.memory_space<vmem>>, vector<128x128xf32>,
      %c0_12 = arith.constant 0 : index
      %c0_13 = arith.constant 0 : index
      %15 = vector.load %arg9[%c0_12, %c0_13] : memref<128x128xf32, #tpu.memory_space<vmem>>, vector<128x128xf32>
      tpu.vector_store %arg9[%c0_12, %c0_13], %11 {strides = array<i32>} : memref<128x128xf32, #tpu.memory_space<vmem>>, vector<128x128xf32>,
      %c0_14 = arith.constant 0 : index
      %c0_15 = arith.constant 0 : index
      %16 = vector.load %arg10[%c0_14, %c0_15] : memref<128x128xf32, #tpu.memory_space<vmem>>, vector<128x128xf32>
      tpu.vector_store %arg10[%c0_14, %c0_15], %11 {strides = array<i32>} : memref<128x128xf32, #tpu.memory_space<vmem>>, vector<128x128xf32>,
      %c0_16 = arith.constant 0 : index
      %c0_17 = arith.constant 0 : index
      %17 = vector.load %arg11[%c0_16, %c0_17] : memref<128x128xf32, #tpu.memory_space<vmem>>, vector<128x128xf32>
      tpu.vector_store %arg11[%c0_16, %c0_17], %11 {strides = array<i32>} : memref<128x128xf32, #tpu.memory_space<vmem>>, vector<128x128xf32>,
      %c0_18 = arith.constant 0 : index
      %c0_19 = arith.constant 0 : index
      %c0_20 = arith.constant 0 : index
      %18 = vector.load %arg3[%c0_18, %c0_19, %c0_20] : memref<2x128x128xf32, #tpu.memory_space<vmem>>, vector<1x128x128xf32>
      %19 = vector.shape_cast %18 : vector<1x128x128xf32> to vector<128x128xf32>
      %c0_21 = arith.constant 0 : index
      %c0_22 = arith.constant 0 : index
      %c0_23 = arith.constant 0 : index
      %20 = vector.load %arg4[%c0_21, %c0_22, %c0_23] : memref<2x128x128xf32, #tpu.memory_space<vmem>>, vector<1x128x128xf32>
      %21 = vector.shape_cast %20 : vector<1x128x128xf32> to vector<128x128xf32>
      %cst_24 = arith.constant dense<0.000000e+00> : vector<128xf32>
      %22 = vector.multi_reduction <add>, %19, %cst_24 [1] : vector<128x128xf32> to vector<128xf32>
      %23 = vector.shape_cast %22 : vector<128xf32> to vector<128x1xf32>
      %cst_25 = arith.constant 7.812500e-03 : f32
      %24 = vector.broadcast %cst_25 : f32 to vector<128x1xf32>
      %25 = arith.mulf %23, %24 : vector<128x1xf32>
      %cst_26 = arith.constant dense<0.000000e+00> : vector<128xf32>
      %26 = vector.multi_reduction <add>, %21, %cst_26 [1] : vector<128x128xf32> to vector<128xf32>
      %27 = vector.shape_cast %26 : vector<128xf32> to vector<128x1xf32>
      %cst_27 = arith.constant 7.812500e-03 : f32
      %28 = vector.broadcast %cst_27 : f32 to vector<128x1xf32>
      %29 = arith.mulf %27, %28 : vector<128x1xf32>
      %30 = vector.shape_cast %25 : vector<128x1xf32> to vector<128x1xf32>
      %31 = vector.broadcast %30 : vector<128x1xf32> to vector<128x128xf32>
      %c0_28 = arith.constant 0 : index
      %c0_29 = arith.constant 0 : index
      %32 = vector.load %arg12[%c0_28, %c0_29] : memref<128x128xf32, #tpu.memory_space<vmem>>, vector<128x128xf32>
      tpu.vector_store %arg12[%c0_28, %c0_29], %31 {strides = array<i32>} : memref<128x128xf32, #tpu.memory_space<vmem>>, vector<128x128xf32>,
      %33 = vector.shape_cast %29 : vector<128x1xf32> to vector<128x1xf32>
      %34 = vector.broadcast %33 : vector<128x1xf32> to vector<128x128xf32>
      %c0_30 = arith.constant 0 : index
      %c0_31 = arith.constant 0 : index
      %35 = vector.load %arg13[%c0_30, %c0_31] : memref<128x128xf32, #tpu.memory_space<vmem>>, vector<128x128xf32>
      tpu.vector_store %arg13[%c0_30, %c0_31], %34 {strides = array<i32>} : memref<128x128xf32, #tpu.memory_space<vmem>>, vector<128x128xf32>,
    } else {
    }
    %c0_i32_3 = arith.constant 0 : i32
    %c16_i32 = arith.constant 16 : i32
    %8 = arith.addi %c0_i32_3, %c16_i32 : i32
    %c1_i32_4 = arith.constant 1 : i32
    scf.for %arg14 = %c0_i32_3 to %8 step %c1_i32_4  : i32 {
      %c1_i32_7 = arith.constant 1 : i32
      %11 = arith.muli %arg14, %c1_i32_7 : i32
      %c0_i32_8 = arith.constant 0 : i32
      %12 = arith.addi %c0_i32_8, %11 : i32
      %c8_i32 = arith.constant 8 : i32
      %13 = arith.muli %12, %c8_i32 : i32
      %14 = tpu.assume_multiple %13, 8 : i32
      %15 = arith.index_cast %14 : i32 to index
      %c0 = arith.constant 0 : index
      %16 = vector.load %arg12[%15, %c0] : memref<128x128xf32, #tpu.memory_space<vmem>>, vector<8x128xf32>
      %17 = arith.index_cast %14 : i32 to index
      %c0_9 = arith.constant 0 : index
      %18 = vector.load %arg13[%17, %c0_9] : memref<128x128xf32, #tpu.memory_space<vmem>>, vector<8x128xf32>
      %cst = arith.constant 0.000000e+00 : f32
      %19 = vector.broadcast %cst : f32 to vector<8x128xf32>
      %c0_10 = arith.constant 0 : index
      %20 = arith.index_cast %14 : i32 to index
      %c0_11 = arith.constant 0 : index
      %21 = vector.load %arg3[%c0_10, %20, %c0_11] : memref<2x128x128xf32, #tpu.memory_space<vmem>>, vector<1x8x128xf32>
      %22 = vector.shape_cast %21 : vector<1x8x128xf32> to vector<8x128xf32>
      %c0_12 = arith.constant 0 : index
      %23 = arith.index_cast %14 : i32 to index
      %c0_13 = arith.constant 0 : index
      %24 = vector.load %arg4[%c0_12, %23, %c0_13] : memref<2x128x128xf32, #tpu.memory_space<vmem>>, vector<1x8x128xf32>
      %25 = vector.shape_cast %24 : vector<1x8x128xf32> to vector<8x128xf32>
      %26 = arith.subf %22, %16 : vector<8x128xf32>
      %27 = arith.subf %25, %18 : vector<8x128xf32>
      %28 = arith.addf %19, %26 : vector<8x128xf32>
      %29 = arith.addf %19, %27 : vector<8x128xf32>
      %30 = arith.mulf %26, %26 : vector<8x128xf32>
      %31 = arith.addf %19, %30 : vector<8x128xf32>
      %32 = arith.mulf %27, %27 : vector<8x128xf32>
      %33 = arith.addf %19, %32 : vector<8x128xf32>
      %34 = arith.mulf %26, %27 : vector<8x128xf32>
      %35 = arith.addf %19, %34 : vector<8x128xf32>
      %cst_14 = arith.constant 1.1920929E-7 : f32
      %36 = vector.broadcast %cst_14 : f32 to vector<8x128xf32>
      %37 = arith.addf %22, %36 : vector<8x128xf32>
      %cst_15 = arith.constant 1.1920929E-7 : f32
      %38 = vector.broadcast %cst_15 : f32 to vector<8x128xf32>
      %39 = arith.addf %25, %38 : vector<8x128xf32>
      %40 = math.log %39 : vector<8x128xf32>
      %41 = arith.mulf %37, %40 : vector<8x128xf32>
      %42 = arith.addf %19, %41 : vector<8x128xf32>
      %c1 = arith.constant 1 : index
      %43 = arith.index_cast %14 : i32 to index
      %c0_16 = arith.constant 0 : index
      %44 = vector.load %arg3[%c1, %43, %c0_16] : memref<2x128x128xf32, #tpu.memory_space<vmem>>, vector<1x8x128xf32>
      %45 = vector.shape_cast %44 : vector<1x8x128xf32> to vector<8x128xf32>
      %c1_17 = arith.constant 1 : index
      %46 = arith.index_cast %14 : i32 to index
      %c0_18 = arith.constant 0 : index
      %47 = vector.load %arg4[%c1_17, %46, %c0_18] : memref<2x128x128xf32, #tpu.memory_space<vmem>>, vector<1x8x128xf32>
      %48 = vector.shape_cast %47 : vector<1x8x128xf32> to vector<8x128xf32>
      %49 = arith.subf %45, %16 : vector<8x128xf32>
      %50 = arith.subf %48, %18 : vector<8x128xf32>
      %51 = arith.addf %28, %49 : vector<8x128xf32>
      %52 = arith.addf %29, %50 : vector<8x128xf32>
      %53 = arith.mulf %49, %49 : vector<8x128xf32>
      %54 = arith.addf %31, %53 : vector<8x128xf32>
      %55 = arith.mulf %50, %50 : vector<8x128xf32>
      %56 = arith.addf %33, %55 : vector<8x128xf32>
      %57 = arith.mulf %49, %50 : vector<8x128xf32>
      %58 = arith.addf %35, %57 : vector<8x128xf32>
      %cst_19 = arith.constant 1.1920929E-7 : f32
      %59 = vector.broadcast %cst_19 : f32 to vector<8x128xf32>
      %60 = arith.addf %45, %59 : vector<8x128xf32>
      %cst_20 = arith.constant 1.1920929E-7 : f32
      %61 = vector.broadcast %cst_20 : f32 to vector<8x128xf32>
      %62 = arith.addf %48, %61 : vector<8x128xf32>
      %63 = math.log %62 : vector<8x128xf32>
      %64 = arith.mulf %60, %63 : vector<8x128xf32>
      %65 = arith.addf %42, %64 : vector<8x128xf32>
      %66 = arith.index_cast %14 : i32 to index
      %c0_21 = arith.constant 0 : index
      %67 = vector.load %arg6[%66, %c0_21] : memref<128x128xf32, #tpu.memory_space<vmem>>, vector<8x128xf32>
      %68 = arith.addf %67, %51 : vector<8x128xf32>
      %69 = arith.index_cast %14 : i32 to index
      %c0_22 = arith.constant 0 : index
      %70 = vector.load %arg6[%69, %c0_22] : memref<128x128xf32, #tpu.memory_space<vmem>>, vector<8x128xf32>
      tpu.vector_store %arg6[%69, %c0_22], %68 {strides = array<i32>} : memref<128x128xf32, #tpu.memory_space<vmem>>, vector<8x128xf32>,
      %71 = arith.index_cast %14 : i32 to index
      %c0_23 = arith.constant 0 : index
      %72 = vector.load %arg7[%71, %c0_23] : memref<128x128xf32, #tpu.memory_space<vmem>>, vector<8x128xf32>
      %73 = arith.addf %72, %52 : vector<8x128xf32>
      %74 = arith.index_cast %14 : i32 to index
      %c0_24 = arith.constant 0 : index
      %75 = vector.load %arg7[%74, %c0_24] : memref<128x128xf32, #tpu.memory_space<vmem>>, vector<8x128xf32>
      tpu.vector_store %arg7[%74, %c0_24], %73 {strides = array<i32>} : memref<128x128xf32, #tpu.memory_space<vmem>>, vector<8x128xf32>,
      %76 = arith.index_cast %14 : i32 to index
      %c0_25 = arith.constant 0 : index
      %77 = vector.load %arg8[%76, %c0_25] : memref<128x128xf32, #tpu.memory_space<vmem>>, vector<8x128xf32>
      %78 = arith.addf %77, %54 : vector<8x128xf32>
      %79 = arith.index_cast %14 : i32 to index
      %c0_26 = arith.constant 0 : index
      %80 = vector.load %arg8[%79, %c0_26] : memref<128x128xf32, #tpu.memory_space<vmem>>, vector<8x128xf32>
      tpu.vector_store %arg8[%79, %c0_26], %78 {strides = array<i32>} : memref<128x128xf32, #tpu.memory_space<vmem>>, vector<8x128xf32>,
      %81 = arith.index_cast %14 : i32 to index
      %c0_27 = arith.constant 0 : index
      %82 = vector.load %arg9[%81, %c0_27] : memref<128x128xf32, #tpu.memory_space<vmem>>, vector<8x128xf32>
      %83 = arith.addf %82, %56 : vector<8x128xf32>
      %84 = arith.index_cast %14 : i32 to index
      %c0_28 = arith.constant 0 : index
      %85 = vector.load %arg9[%84, %c0_28] : memref<128x128xf32, #tpu.memory_space<vmem>>, vector<8x128xf32>
      tpu.vector_store %arg9[%84, %c0_28], %83 {strides = array<i32>} : memref<128x128xf32, #tpu.memory_space<vmem>>, vector<8x128xf32>,
      %86 = arith.index_cast %14 : i32 to index
      %c0_29 = arith.constant 0 : index
      %87 = vector.load %arg10[%86, %c0_29] : memref<128x128xf32, #tpu.memory_space<vmem>>, vector<8x128xf32>
      %88 = arith.addf %87, %58 : vector<8x128xf32>
      %89 = arith.index_cast %14 : i32 to index
      %c0_30 = arith.constant 0 : index
      %90 = vector.load %arg10[%89, %c0_30] : memref<128x128xf32, #tpu.memory_space<vmem>>, vector<8x128xf32>
      tpu.vector_store %arg10[%89, %c0_30], %88 {strides = array<i32>} : memref<128x128xf32, #tpu.memory_space<vmem>>, vector<8x128xf32>,
      %91 = arith.index_cast %14 : i32 to index
      %c0_31 = arith.constant 0 : index
      %92 = vector.load %arg11[%91, %c0_31] : memref<128x128xf32, #tpu.memory_space<vmem>>, vector<8x128xf32>
      %93 = arith.addf %92, %65 : vector<8x128xf32>
      %94 = arith.index_cast %14 : i32 to index
      %c0_32 = arith.constant 0 : index
      %95 = vector.load %arg11[%94, %c0_32] : memref<128x128xf32, #tpu.memory_space<vmem>>, vector<8x128xf32>
      tpu.vector_store %arg11[%94, %c0_32], %93 {strides = array<i32>} : memref<128x128xf32, #tpu.memory_space<vmem>>, vector<8x128xf32>,
    }
    %c16_i32_5 = arith.constant 16 : i32
    %9 = arith.extui %5 : i1 to i32
    %c0_i32_6 = arith.constant 0 : i32
    %10 = arith.cmpi ne, %9, %c0_i32_6 : i32
    scf.if %10 {
      %c0 = arith.constant 0 : index
      %c0_7 = arith.constant 0 : index
      %11 = vector.load %arg6[%c0, %c0_7] : memref<128x128xf32, #tpu.memory_space<vmem>>, vector<128x128xf32>
      %cst = arith.constant dense<0.000000e+00> : vector<128xf32>
      %12 = vector.multi_reduction <add>, %11, %cst [1] : vector<128x128xf32> to vector<128xf32>
      %13 = vector.shape_cast %12 : vector<128xf32> to vector<128x1xf32>
      %c0_8 = arith.constant 0 : index
      %c0_9 = arith.constant 0 : index
      %14 = vector.load %arg7[%c0_8, %c0_9] : memref<128x128xf32, #tpu.memory_space<vmem>>, vector<128x128xf32>
      %cst_10 = arith.constant dense<0.000000e+00> : vector<128xf32>
      %15 = vector.multi_reduction <add>, %14, %cst_10 [1] : vector<128x128xf32> to vector<128xf32>
      %16 = vector.shape_cast %15 : vector<128xf32> to vector<128x1xf32>
      %c0_11 = arith.constant 0 : index
      %c0_12 = arith.constant 0 : index
      %17 = vector.load %arg8[%c0_11, %c0_12] : memref<128x128xf32, #tpu.memory_space<vmem>>, vector<128x128xf32>
      %cst_13 = arith.constant dense<0.000000e+00> : vector<128xf32>
      %18 = vector.multi_reduction <add>, %17, %cst_13 [1] : vector<128x128xf32> to vector<128xf32>
      %19 = vector.shape_cast %18 : vector<128xf32> to vector<128x1xf32>
      %c0_14 = arith.constant 0 : index
      %c0_15 = arith.constant 0 : index
      %20 = vector.load %arg9[%c0_14, %c0_15] : memref<128x128xf32, #tpu.memory_space<vmem>>, vector<128x128xf32>
      %cst_16 = arith.constant dense<0.000000e+00> : vector<128xf32>
      %21 = vector.multi_reduction <add>, %20, %cst_16 [1] : vector<128x128xf32> to vector<128xf32>
      %22 = vector.shape_cast %21 : vector<128xf32> to vector<128x1xf32>
      %c0_17 = arith.constant 0 : index
      %c0_18 = arith.constant 0 : index
      %23 = vector.load %arg10[%c0_17, %c0_18] : memref<128x128xf32, #tpu.memory_space<vmem>>, vector<128x128xf32>
      %cst_19 = arith.constant dense<0.000000e+00> : vector<128xf32>
      %24 = vector.multi_reduction <add>, %23, %cst_19 [1] : vector<128x128xf32> to vector<128xf32>
      %25 = vector.shape_cast %24 : vector<128xf32> to vector<128x1xf32>
      %c0_20 = arith.constant 0 : index
      %c0_21 = arith.constant 0 : index
      %26 = vector.load %arg11[%c0_20, %c0_21] : memref<128x128xf32, #tpu.memory_space<vmem>>, vector<128x128xf32>
      %cst_22 = arith.constant dense<0.000000e+00> : vector<128xf32>
      %27 = vector.multi_reduction <add>, %26, %cst_22 [1] : vector<128x128xf32> to vector<128xf32>
      %28 = vector.shape_cast %27 : vector<128xf32> to vector<128x1xf32>
      %c0_23 = arith.constant 0 : index
      %c0_24 = arith.constant 0 : index
      %29 = vector.load %arg13[%c0_23, %c0_24] : memref<128x128xf32, #tpu.memory_space<vmem>>, vector<128x1xf32>
      %cst_25 = arith.constant 1.1920929E-7 : f32
      %30 = vector.broadcast %cst_25 : f32 to vector<128x1xf32>
      %31 = arith.addf %29, %30 : vector<128x1xf32>
      %cst_26 = arith.constant 5.120000e+02 : f32
      %32 = vector.broadcast %cst_26 : f32 to vector<128x1xf32>
      %33 = arith.mulf %32, %31 : vector<128x1xf32>
      %34 = arith.addf %16, %33 : vector<128x1xf32>
      %35 = arith.subf %34, %28 : vector<128x1xf32>
      %cst_27 = arith.constant 5.120000e+02 : f32
      %36 = vector.broadcast %cst_27 : f32 to vector<128x1xf32>
      %37 = arith.divf %13, %36 : vector<128x1xf32>
      %cst_28 = arith.constant 5.120000e+02 : f32
      %38 = vector.broadcast %cst_28 : f32 to vector<128x1xf32>
      %39 = arith.divf %16, %38 : vector<128x1xf32>
      %cst_29 = arith.constant 5.120000e+02 : f32
      %40 = vector.broadcast %cst_29 : f32 to vector<128x1xf32>
      %41 = arith.mulf %40, %37 : vector<128x1xf32>
      %42 = arith.mulf %41, %37 : vector<128x1xf32>
      %43 = arith.subf %19, %42 : vector<128x1xf32>
      %cst_30 = arith.constant 0.000000e+00 : f32
      %44 = vector.broadcast %cst_30 : f32 to vector<128x1xf32>
      %45 = arith.maximumf %43, %44 : vector<128x1xf32>
      %cst_31 = arith.constant 5.120000e+02 : f32
      %46 = vector.broadcast %cst_31 : f32 to vector<128x1xf32>
      %47 = arith.mulf %46, %39 : vector<128x1xf32>
      %48 = arith.mulf %47, %39 : vector<128x1xf32>
      %49 = arith.subf %22, %48 : vector<128x1xf32>
      %cst_32 = arith.constant 0.000000e+00 : f32
      %50 = vector.broadcast %cst_32 : f32 to vector<128x1xf32>
      %51 = arith.maximumf %49, %50 : vector<128x1xf32>
      %cst_33 = arith.constant 5.120000e+02 : f32
      %cst_34 = arith.constant 1.000000e+00 : f32
      %52 = arith.subf %cst_33, %cst_34 : f32
      %53 = vector.broadcast %52 : f32 to vector<128x1xf32>
      %54 = arith.divf %45, %53 : vector<128x1xf32>
      %55 = math.sqrt %54 : vector<128x1xf32>
      %cst_35 = arith.constant 5.120000e+02 : f32
      %cst_36 = arith.constant 1.000000e+00 : f32
      %56 = arith.subf %cst_35, %cst_36 : f32
      %57 = vector.broadcast %56 : f32 to vector<128x1xf32>
      %58 = arith.divf %51, %57 : vector<128x1xf32>
      %59 = math.sqrt %58 : vector<128x1xf32>
      %cst_37 = arith.constant 5.120000e+02 : f32
      %60 = vector.broadcast %cst_37 : f32 to vector<128x1xf32>
      %61 = arith.mulf %60, %37 : vector<128x1xf32>
      %62 = arith.mulf %61, %39 : vector<128x1xf32>
      %63 = arith.subf %25, %62 : vector<128x1xf32>
      %cst_38 = arith.constant 5.120000e+02 : f32
      %64 = vector.broadcast %cst_38 : f32 to vector<128x1xf32>
      %65 = arith.divf %63, %64 : vector<128x1xf32>
      %cst_39 = arith.constant 1.1920929E-7 : f32
      %66 = vector.broadcast %cst_39 : f32 to vector<128x1xf32>
      %67 = arith.addf %55, %66 : vector<128x1xf32>
      %cst_40 = arith.constant 1.1920929E-7 : f32
      %68 = vector.broadcast %cst_40 : f32 to vector<128x1xf32>
      %69 = arith.addf %59, %68 : vector<128x1xf32>
      %70 = arith.mulf %67, %69 : vector<128x1xf32>
      %71 = arith.divf %65, %70 : vector<128x1xf32>
      %cst_41 = arith.constant 1.000000e+00 : f32
      %72 = vector.broadcast %cst_41 : f32 to vector<128x1xf32>
      %73 = arith.subf %72, %71 : vector<128x1xf32>
      %cst_42 = arith.constant 1.000000e+03 : f32
      %74 = vector.broadcast %cst_42 : f32 to vector<128x1xf32>
      %75 = arith.mulf %74, %73 : vector<128x1xf32>
      %76 = arith.addf %35, %75 : vector<128x1xf32>
      %c0_43 = arith.constant 0 : index
      %c0_44 = arith.constant 0 : index
      %77 = vector.load %arg5[%c0_43, %c0_44] : memref<128x1xf32, #tpu.memory_space<vmem>>, vector<128x1xf32>
      tpu.vector_store %arg5[%c0_43, %c0_44], %76 {strides = array<i32>} : memref<128x1xf32, #tpu.memory_space<vmem>>, vector<128x1xf32>,
    } else {
    }
    return
  }
  func.func @transform_0(%arg0: i32, %arg1: i32, %arg2: i32) -> (i32, i32, i32) {
    %c0_i32 = arith.constant 0 : i32
    return %arg1, %arg0, %arg2 : i32, i32, i32
  }
  func.func @transform_1(%arg0: i32, %arg1: i32, %arg2: i32) -> (i32, i32, i32) {
    %c0_i32 = arith.constant 0 : i32
    return %arg1, %arg0, %arg2 : i32, i32, i32
  }
  func.func @transform_2(%arg0: i32, %arg1: i32, %arg2: i32) -> (i32, i32) {
    %c0_i32 = arith.constant 0 : i32
    %c0_i32_0 = arith.constant 0 : i32
    return %arg0, %c0_i32 : i32, i32
  }
}

</mosaic_0001>

<llo_original>
// kernel: tpu_custom_call.1
$region0: #{tpu_custom_call.1}
  #allocation0 [shape = 'u32[]', space=smem, size = 0x4, offset = 0x4, fixed_abs, tag = 'smem constant byte address 0x4 - core index']
  #allocation1 [shape = 'u32[144,128]{1,0:T(1,128)}', space=vmem, size = 0x12000, scoped, tag = 'internal scratch']
  #allocation2 [shape = 'f32[128,128]{1,0:T(8,128)}', space=vmem, size = 0x10000, scoped, tag = 'scratch operand']
  #allocation3 [shape = 'f32[128,128]{1,0:T(8,128)}', space=vmem, size = 0x10000, scoped, tag = 'scratch operand']
  #allocation4 [shape = 'f32[128,128]{1,0:T(8,128)}', space=vmem, size = 0x10000, scoped, tag = 'scratch operand']
  #allocation5 [shape = 'f32[128,128]{1,0:T(8,128)}', space=vmem, size = 0x10000, scoped, tag = 'scratch operand']
  #allocation6 [shape = 'f32[128,128]{1,0:T(8,128)}', space=vmem, size = 0x10000, scoped, tag = 'scratch operand']
  #allocation7 [shape = 'f32[128,128]{1,0:T(8,128)}', space=vmem, size = 0x10000, scoped, tag = 'scratch operand']
  #allocation8 [shape = 'f32[128,128]{1,0:T(8,128)}', space=vmem, size = 0x10000, scoped, tag = 'scratch operand']
  #allocation9 [shape = 'f32[128,128]{1,0:T(8,128)}', space=vmem, size = 0x10000, scoped, tag = 'scratch operand']
  #allocation14 [shape = 's32[]', space=sflag, size = 0x4, offset = 0, fixed_abs, tag = 'sflag constant byte address 0x0 - dummy sync flag']
  #allocation16 [shape = 's32[]', space=sflag, size = 0x4, offset = 0, fixed_abs, tag = 'sflag constant byte address 0x0 - dummy sync flag']
  %s0 = inlined_call_operand.hbm [shape: f32[2,256,256], index: 0, kind: input, shape index: {}]
  %s1 = inlined_call_operand.hbm [shape: f32[2,256,256], index: 1, kind: input, shape index: {}]
  %s2 = inlined_call_operand.vmem [shape: f32[256,1], index: 2, kind: output, shape index: {}]
  %s3 = sld [smem:[#allocation0]]
  $region64: #{tpu_custom_call.1} parent=0
    _
  %s5 = ssub.s32 1, %s3
  %s6 = scalar_select 0, %s5, %s3
  $region1: #{tpu_custom_call.1} parent=0
    #allocation10 [shape = 'u8[262144]{0}', space=vmem, size = 0x40000, scoped, tag = 'input window, operand 0']
    #allocation11 [shape = 's32[2]{0}', space=sflag, size = 0x8, scoped, tag = 'scoped memory for tpu_custom_call.1']
    #allocation12 [shape = 'u8[262144]{0}', space=vmem, size = 0x40000, scoped, tag = 'input window, operand 1']
    #allocation13 [shape = 's32[2]{0}', space=sflag, size = 0x8, scoped, tag = 'scoped memory for tpu_custom_call.1']
    %7 = vsyncpa [#allocation11], 0
    %s8 = scalar_lea.sflag [#allocation11], 1
    %9 = vsyncpa %s8, 0
    %10 = vsyncpa [#allocation13], 0
    %s11 = scalar_lea.sflag [#allocation13], 1
    %12 = vsyncpa %s11, 0
    loop: start=0, step=1, limit=6
    $region2: #{tpu_custom_call.1} parent=1 // loop_pre_header
      _
    $region3: #{tpu_custom_call.1} parent=1 // loop_header
      %s14 = sphi 0, %s18
      %p15 = scmp.ge.s32.totalorder %s14, 6
      %s21 = sphi 0, %s40
      %s22 = sphi 0, %s36
      %s23 = sphi 0, %s32
      %s24 = sphi 0, %s21
      %s25 = sphi 0, %s22
      %s26 = sphi 0, %s23
      %s27 = sphi 0, %s24
      %s28 = sphi 0, %s25
      %s29 = sphi 0, %s26
      %s47 = sphi 0, %s49
      %s50 = sphi 0, %s47
      %s51 = sphi 0, %s50
      %s67 = sphi 0, %s51
      %s77 = sphi 0, %s79
      %s80 = sphi 0, %s77
      %s81 = sphi 0, %s80
      %s97 = sphi 0, %s81
      %s103 = sphi 0, %s105
      %s106 = sphi 0, %s103
      %s107 = sphi 0, %s106
      %s123 = sphi 0, %s107
    $region4: #{tpu_custom_call.1} parent=1 // loop_header_branch
      %17 = sbr.rel (%p15) target = $region8
    $region5: #{tpu_custom_call.1} parent=1 // loop_body
      %s19 = ssub.s32 %s14, 1
      %s20 = ssub.s32 %s14, 2
      %s30 = sadd.s32 1, %s23
      %p31 = scmp.ge.s32.totalorder %s30, 2
      %s32 = scalar_select %p31, 0, %s30
      %s33 = sadd.s32 1, %s22
      %s34 = scalar_select %p31, %s33, %s22
      %p35 = scmp.ge.s32.totalorder %s34, 1
      %s36 = scalar_select %p35, 0, %s34
      %s37 = sadd.s32 1, %s21
      %s38 = scalar_select %p35, %s37, %s21
      %p39 = scmp.ge.s32.totalorder %s38, 2
      %s40 = scalar_select %p39, 0, %s38
      %s41 = ssub.s32 %s22, %s36
      %s42 = ssub.s32 %s21, %s40
      %s43 = sor.u32 %s41, %s42
      %s44 = ssub.s32 %s23, %s32
      %s45 = sor.u32 %s43, %s44
      %p46 = scmp.eq.s32.totalorder %s45, 0
      %s48 = sadd.s32 %s47, 1
      %s49 = scalar_select %p46, %s47, %s48
      %p52 = pneg %p46
      %p53 = scmp.eq.s32.totalorder %s14, 3
      %p54 = por %p52, %p53
      %p55 = scmp.ne.s32.totalorder %s47, %s50
      %p56 = scmp.eq.s32.totalorder %s14, 0
      %p57 = por %p55, %p56
      %p58 = scmp.ne.s32.totalorder %s47, %s50
      %p59 = scmp.eq.s32.totalorder %s19, 3
      %p60 = por %p58, %p59
      %p61 = scmp.ne.s32.totalorder %s50, %s51
      %p62 = scmp.eq.s32.totalorder %s19, 0
      %p63 = por %p61, %p62
      %p64 = scmp.ne.s32.totalorder %s50, %s51
      %p65 = scmp.eq.s32.totalorder %s20, 3
      %p66 = por %p64, %p65
      %p68 = scmp.ne.s32.totalorder %s51, %s67
      %p69 = scmp.eq.s32.totalorder %s20, 0
      %p70 = por %p68, %p69
      %s71 = ssub.s32 %s22, %s36
      %s72 = ssub.s32 %s21, %s40
      %s73 = sor.u32 %s71, %s72
      %s74 = ssub.s32 %s23, %s32
      %s75 = sor.u32 %s73, %s74
      %p76 = scmp.eq.s32.totalorder %s75, 0
      %s78 = sadd.s32 %s77, 1
      %s79 = scalar_select %p76, %s77, %s78
      %p82 = pneg %p76
      %p83 = scmp.eq.s32.totalorder %s14, 3
      %p84 = por %p82, %p83
      %p85 = scmp.ne.s32.totalorder %s77, %s80
      %p86 = scmp.eq.s32.totalorder %s14, 0
      %p87 = por %p85, %p86
      %p88 = scmp.ne.s32.totalorder %s77, %s80
      %p89 = scmp.eq.s32.totalorder %s19, 3
      %p90 = por %p88, %p89
      %p91 = scmp.ne.s32.totalorder %s80, %s81
      %p92 = scmp.eq.s32.totalorder %s19, 0
      %p93 = por %p91, %p92
      %p94 = scmp.ne.s32.totalorder %s80, %s81
      %p95 = scmp.eq.s32.totalorder %s20, 3
      %p96 = por %p94, %p95
      %p98 = scmp.ne.s32.totalorder %s81, %s97
      %p99 = scmp.eq.s32.totalorder %s20, 0
      %p100 = por %p98, %p99
      %s101 = ssub.s32 %s21, %s40
      %p102 = scmp.eq.s32.totalorder %s101, 0
      %s104 = sadd.s32 %s103, 1
      %s105 = scalar_select %p102, %s103, %s104
      %p108 = pneg %p102
      %p109 = scmp.eq.s32.totalorder %s14, 3
      %p110 = por %p108, %p109
      %p111 = scmp.ne.s32.totalorder %s103, %s106
      %p112 = scmp.eq.s32.totalorder %s14, 0
      %p113 = por %p111, %p112
      %p114 = scmp.ne.s32.totalorder %s103, %s106
      %p115 = scmp.eq.s32.totalorder %s19, 3
      %p116 = por %p114, %p115
      %p117 = scmp.ne.s32.totalorder %s106, %s107
      %p118 = scmp.eq.s32.totalorder %s19, 0
      %p119 = por %p117, %p118
      %p120 = scmp.ne.s32.totalorder %s106, %s107
      %p121 = scmp.eq.s32.totalorder %s20, 3
      %p122 = por %p120, %p121
      %p124 = scmp.ne.s32.totalorder %s107, %s123
      %p125 = scmp.eq.s32.totalorder %s20, 0
      %p126 = por %p124, %p125
      %p127 = scmp.le.s32.totalorder 1, %s14
      %p128 = scmp.lt.s32.totalorder %s14, 5
      %p129 = pnand %p127, %p128
      %p130 = pneg %p129
      // Predicated region
      $region9: #{tpu_custom_call.1} parent=5 // pred_check
        _
      $region10: #{tpu_custom_call.1} parent=5 // pred_check_branch
        %132 = sbr.rel (%p129) target = $region12
      $region11: #{tpu_custom_call.1} parent=5 // pred_region
        %s133 = ssub.s32 %s14, 1
      $region12: #{tpu_custom_call.1} parent=5 // pred_fallthru
        _
      %p134 = scmp.lt.s32.totalorder %s14, 4
      // Predicated region
      $region13: #{tpu_custom_call.1} parent=5 // pred_check
        %p135 = pneg %p134
      $region14: #{tpu_custom_call.1} parent=5 // pred_check_branch
        %137 = sbr.rel (%p135) target = $region16
      $region15: #{tpu_custom_call.1} parent=5 // pred_region
        // Predicated region
        $region17: #{tpu_custom_call.1} parent=15 // pred_check
          %p138 = pneg %p57
        $region18: #{tpu_custom_call.1} parent=15 // pred_check_branch
          %140 = sbr.rel (%p138) target = $region20
        $region19: #{tpu_custom_call.1} parent=15 // pred_region
          #allocation15 [shape = 'u32[6]{0}', space=smem, size = 0x18, scoped, tag = 'DMA stride descriptor']
          %s141 = sand.u32 %s47, 1
          %s142 = scalar_lea.sflag [#allocation11], %s141
          %s143 = sand.u32 %s47, 1
          %s144 = smul.addr %s143, 256
          %s145 = scalar_lea.vmem [#allocation10], %s144
          %s146 = smul.u32 2, %s22
          %s147 = smul.u32 16, %s21
          %s149 = ssub.s32 4096, 4096
          %150 = vsyncadd %s142, %s149
          %s151 = smul.addr %s147, 2
          %s152 = sadd.s32 %s23, %s151
          %s153 = smul.addr %s146, 64
          %s154 = sadd.s32 %s152, %s153
          %s155 = smul.addr %s154, 128
          %s156 = scalar_lea.hbm %s0, %s155
          %s158 = sshll.u32 1, 14
          %s159 = sxor.u32 4294967295, %s158
          %s161 = sld [smem:[#allocation0]]
          %s162 = sadd.s32 2, %s161
          %s164 = sshll.u32 7, 26
          %s165 = sxor.u32 4294967295, %s164
          %s166 = sand.u32 0, %s165
          %s167 = sshll.u32 %s162, 26
          %s168 = sor.u32 %s166, %s167
          %s169 = sshll.u32 %s145, 4
          %s170 = int_to_ptr.vmem [resolvable:$true] %s169
          %176 = sst [smem:[#allocation15]] 8192
          %s177 = scalar_lea.smem [#allocation15], 1
          %178 = sst [smem:[%s177]] 2048
          %s179 = scalar_lea.smem [#allocation15], 2
          %180 = sst [smem:[%s179]] 16
          %s181 = scalar_lea.smem [#allocation15], 3
          %182 = sst [smem:[%s181]] 256
          %s183 = scalar_lea.smem [#allocation15], 4
          %184 = sst [smem:[%s183]] 128
          %s185 = scalar_lea.smem [#allocation15], 5
          %186 = sst [smem:[%s185]] 8
          %188 = dma.general %s156, 4096, %s170, %s142, [#allocation14], [#allocation15], %s168, 0
        $region20: #{tpu_custom_call.1} parent=15 // pred_fallthru
          _
        // Predicated region
        $region21: #{tpu_custom_call.1} parent=15 // pred_check
          %p189 = pneg %p87
        $region22: #{tpu_custom_call.1} parent=15 // pred_check_branch
          %191 = sbr.rel (%p189) target = $region24
        $region23: #{tpu_custom_call.1} parent=15 // pred_region
          #allocation17 [shape = 'u32[6]{0}', space=smem, size = 0x18, scoped, tag = 'DMA stride descriptor']
          %s192 = sand.u32 %s77, 1
          %s193 = scalar_lea.sflag [#allocation13], %s192
          %s194 = sand.u32 %s77, 1
          %s195 = smul.addr %s194, 256
          %s196 = scalar_lea.vmem [#allocation12], %s195
          %s197 = smul.u32 2, %s22
          %s198 = smul.u32 16, %s21
          %s200 = ssub.s32 4096, 4096
          %201 = vsyncadd %s193, %s200
          %s202 = smul.addr %s198, 2
          %s203 = sadd.s32 %s23, %s202
          %s204 = smul.addr %s197, 64
          %s205 = sadd.s32 %s203, %s204
          %s206 = smul.addr %s205, 128
          %s207 = scalar_lea.hbm %s1, %s206
          %s209 = sshll.u32 1, 14
          %s210 = sxor.u32 4294967295, %s209
          %s212 = sld [smem:[#allocation0]]
          %s213 = sadd.s32 2, %s212
          %s215 = sshll.u32 7, 26
          %s216 = sxor.u32 4294967295, %s215
          %s217 = sand.u32 0, %s216
          %s218 = sshll.u32 %s213, 26
          %s219 = sor.u32 %s217, %s218
          %s220 = sshll.u32 %s196, 4
          %s221 = int_to_ptr.vmem [resolvable:$true] %s220
          %227 = sst [smem:[#allocation17]] 8192
          %s228 = scalar_lea.smem [#allocation17], 1
          %229 = sst [smem:[%s228]] 2048
          %s230 = scalar_lea.smem [#allocation17], 2
          %231 = sst [smem:[%s230]] 16
          %s232 = scalar_lea.smem [#allocation17], 3
          %233 = sst [smem:[%s232]] 256
          %s234 = scalar_lea.smem [#allocation17], 4
          %235 = sst [smem:[%s234]] 128
          %s236 = scalar_lea.smem [#allocation17], 5
          %237 = sst [smem:[%s236]] 8
          %239 = dma.general %s207, 4096, %s221, %s193, [#allocation16], [#allocation17], %s219, 0
        $region24: #{tpu_custom_call.1} parent=15 // pred_fallthru
          _
      $region16: #{tpu_custom_call.1} parent=5 // pred_fallthru
        _
      %p240 = scmp.le.s32.totalorder 1, %s14
      %p241 = scmp.lt.s32.totalorder %s14, 5
      %p242 = pnand %p240, %p241
      %p243 = pneg %p242
      // Predicated region
      $region25: #{tpu_custom_call.1} parent=5 // pred_check
        _
      $region26: #{tpu_custom_call.1} parent=5 // pred_check_branch
        %245 = sbr.rel (%p242) target = $region28
      $region27: #{tpu_custom_call.1} parent=5 // pred_region
        %s246 = ssub.s32 %s14, 1
        %s247 = sand.u32 %s50, 1
        %s248 = scalar_lea.sflag [#allocation11], %s247
        %s249 = sand.u32 %s50, 1
        %s250 = smul.addr %s249, 256
        %s251 = scalar_lea.vmem [#allocation10], %s250
        // Predicated region
        $region29: #{tpu_custom_call.1} parent=27 // pred_check
          %p252 = pneg %p63
        $region30: #{tpu_custom_call.1} parent=27 // pred_check_branch
          %254 = sbr.rel (%p252) target = $region32
        $region31: #{tpu_custom_call.1} parent=27 // pred_region
          %255 = dma.done %s248, 4096
        $region32: #{tpu_custom_call.1} parent=27 // pred_fallthru
          _
        %s256 = sand.u32 %s80, 1
        %s257 = scalar_lea.sflag [#allocation13], %s256
        %s258 = sand.u32 %s80, 1
        %s259 = smul.addr %s258, 256
        %s260 = scalar_lea.vmem [#allocation12], %s259
        // Predicated region
        $region33: #{tpu_custom_call.1} parent=27 // pred_check
          %p261 = pneg %p93
        $region34: #{tpu_custom_call.1} parent=27 // pred_check_branch
          %263 = sbr.rel (%p261) target = $region36
        $region35: #{tpu_custom_call.1} parent=27 // pred_region
          %264 = dma.done %s257, 4096
        $region36: #{tpu_custom_call.1} parent=27 // pred_fallthru
          _
        %s265 = sand.u32 %s50, 1
        %s266 = scalar_lea.sflag [#allocation11], %s265
        %s267 = sand.u32 %s50, 1
        %s268 = smul.addr %s267, 256
        %s269 = scalar_lea.vmem [#allocation10], %s268
        %p270 = pneg %p63
        %p271 = pneg %p60
        %s272 = sand.u32 %s80, 1
        %s273 = scalar_lea.sflag [#allocation13], %s272
        %s274 = sand.u32 %s80, 1
        %s275 = smul.addr %s274, 256
        %s276 = scalar_lea.vmem [#allocation12], %s275
        %p277 = pneg %p93
        %p278 = pneg %p90
        %p279 = pneg %p119
        %p280 = pneg %p116
        %s281 = smul.u32 16, %s24
        %p282 = scmp.lt.s32.totalorder %s281, 31
        %s283 = scalar_select %p282, %s281, 31
        %s284 = smul.addr %s283, 8
        %s285 = scalar_lea.vmem %s2, %s284
        %s286 = smul.u32 2, %s25
        %s287 = smul.u32 16, %s24
        %s288 = smul.u32 2, %s25
        %s289 = smul.u32 16, %s24
        %s290 = smul.u32 16, %s24
        %p291 = scmp.lt.s32.totalorder %s290, 31
        %s292 = scalar_select %p291, %s290, 31
        %s293 = smul.addr %s292, 8
        %s294 = scalar_lea.vmem %s2, %s293
        %s295 = smul.u32 16, %s24
        %p296 = scmp.eq.s32.totalorder %s25, 0
        %p297 = scmp.eq.s32.totalorder %s26, 0
        %p298 = pnand %p296, %p297
        %p299 = pneg %p298
        %p300 = scmp.eq.s32.totalorder %s26, 1
        %p301 = pnand %p296, %p300
        %p302 = pneg %p301
        // Predicated region
        $region37: #{tpu_custom_call.1} parent=27 // pred_check
          _
        $region38: #{tpu_custom_call.1} parent=27 // pred_check_branch
          %304 = sbr.rel (%p298) target = $region40
        $region39: #{tpu_custom_call.1} parent=27 // pred_region
          %305 = vst [vmem:[#allocation2] sm:$0xff] 0.0
          %306 = vst [vmem:[#allocation2 + $0x8] sm:$0xff] 0.0
          %307 = vst [vmem:[#allocation2 + $0x10] sm:$0xff] 0.0
          %308 = vst [vmem:[#allocation2 + $0x18] sm:$0xff] 0.0
          %309 = vst [vmem:[#allocation2 + $0x20] sm:$0xff] 0.0
          %310 = vst [vmem:[#allocation2 + $0x28] sm:$0xff] 0.0
          %311 = vst [vmem:[#allocation2 + $0x30] sm:$0xff] 0.0
          %312 = vst [vmem:[#allocation2 + $0x38] sm:$0xff] 0.0
          %313 = vst [vmem:[#allocation2 + $0x40] sm:$0xff] 0.0
          %314 = vst [vmem:[#allocation2 + $0x48] sm:$0xff] 0.0
          %315 = vst [vmem:[#allocation2 + $0x50] sm:$0xff] 0.0
          %316 = vst [vmem:[#allocation2 + $0x58] sm:$0xff] 0.0
          %317 = vst [vmem:[#allocation2 + $0x60] sm:$0xff] 0.0
          %318 = vst [vmem:[#allocation2 + $0x68] sm:$0xff] 0.0
          %319 = vst [vmem:[#allocation2 + $0x70] sm:$0xff] 0.0
          %320 = vst [vmem:[#allocation2 + $0x78] sm:$0xff] 0.0
          %321 = vst [vmem:[#allocation3] sm:$0xff] 0.0
          %322 = vst [vmem:[#allocation3 + $0x8] sm:$0xff] 0.0
          %323 = vst [vmem:[#allocation3 + $0x10] sm:$0xff] 0.0
          %324 = vst [vmem:[#allocation3 + $0x18] sm:$0xff] 0.0
          %325 = vst [vmem:[#allocation3 + $0x20] sm:$0xff] 0.0
          %326 = vst [vmem:[#allocation3 + $0x28] sm:$0xff] 0.0
          %327 = vst [vmem:[#allocation3 + $0x30] sm:$0xff] 0.0
          %328 = vst [vmem:[#allocation3 + $0x38] sm:$0xff] 0.0
          %329 = vst [vmem:[#allocation3 + $0x40] sm:$0xff] 0.0
          %330 = vst [vmem:[#allocation3 + $0x48] sm:$0xff] 0.0
          %331 = vst [vmem:[#allocation3 + $0x50] sm:$0xff] 0.0
          %332 = vst [vmem:[#allocation3 + $0x58] sm:$0xff] 0.0
          %333 = vst [vmem:[#allocation3 + $0x60] sm:$0xff] 0.0
          %334 = vst [vmem:[#allocation3 + $0x68] sm:$0xff] 0.0
          %335 = vst [vmem:[#allocation3 + $0x70] sm:$0xff] 0.0
          %336 = vst [vmem:[#allocation3 + $0x78] sm:$0xff] 0.0
          %337 = vst [vmem:[#allocation4] sm:$0xff] 0.0
          %338 = vst [vmem:[#allocation4 + $0x8] sm:$0xff] 0.0
          %339 = vst [vmem:[#allocation4 + $0x10] sm:$0xff] 0.0
          %340 = vst [vmem:[#allocation4 + $0x18] sm:$0xff] 0.0
          %341 = vst [vmem:[#allocation4 + $0x20] sm:$0xff] 0.0
          %342 = vst [vmem:[#allocation4 + $0x28] sm:$0xff] 0.0
          %343 = vst [vmem:[#allocation4 + $0x30] sm:$0xff] 0.0
          %344 = vst [vmem:[#allocation4 + $0x38] sm:$0xff] 0.0
          %345 = vst [vmem:[#allocation4 + $0x40] sm:$0xff] 0.0
          %346 = vst [vmem:[#allocation4 + $0x48] sm:$0xff] 0.0
          %347 = vst [vmem:[#allocation4 + $0x50] sm:$0xff] 0.0
          %348 = vst [vmem:[#allocation4 + $0x58] sm:$0xff] 0.0
          %349 = vst [vmem:[#allocation4 + $0x60] sm:$0xff] 0.0
          %350 = vst [vmem:[#allocation4 + $0x68] sm:$0xff] 0.0
          %351 = vst [vmem:[#allocation4 + $0x70] sm:$0xff] 0.0
          %352 = vst [vmem:[#allocation4 + $0x78] sm:$0xff] 0.0
          %353 = vst [vmem:[#allocation5] sm:$0xff] 0.0
          %354 = vst [vmem:[#allocation5 + $0x8] sm:$0xff] 0.0
          %355 = vst [vmem:[#allocation5 + $0x10] sm:$0xff] 0.0
          %356 = vst [vmem:[#allocation5 + $0x18] sm:$0xff] 0.0
          %357 = vst [vmem:[#allocation5 + $0x20] sm:$0xff] 0.0
          %358 = vst [vmem:[#allocation5 + $0x28] sm:$0xff] 0.0
          %359 = vst [vmem:[#allocation5 + $0x30] sm:$0xff] 0.0
          %360 = vst [vmem:[#allocation5 + $0x38] sm:$0xff] 0.0
          %361 = vst [vmem:[#allocation5 + $0x40] sm:$0xff] 0.0
          %362 = vst [vmem:[#allocation5 + $0x48] sm:$0xff] 0.0
          %363 = vst [vmem:[#allocation5 + $0x50] sm:$0xff] 0.0
          %364 = vst [vmem:[#allocation5 + $0x58] sm:$0xff] 0.0
          %365 = vst [vmem:[#allocation5 + $0x60] sm:$0xff] 0.0
          %366 = vst [vmem:[#allocation5 + $0x68] sm:$0xff] 0.0
          %367 = vst [vmem:[#allocation5 + $0x70] sm:$0xff] 0.0
          %368 = vst [vmem:[#allocation5 + $0x78] sm:$0xff] 0.0
          %369 = vst [vmem:[#allocation6] sm:$0xff] 0.0
          %370 = vst [vmem:[#allocation6 + $0x8] sm:$0xff] 0.0
          %371 = vst [vmem:[#allocation6 + $0x10] sm:$0xff] 0.0
          %372 = vst [vmem:[#allocation6 + $0x18] sm:$0xff] 0.0
          %373 = vst [vmem:[#allocation6 + $0x20] sm:$0xff] 0.0
          %374 = vst [vmem:[#allocation6 + $0x28] sm:$0xff] 0.0
          %375 = vst [vmem:[#allocation6 + $0x30] sm:$0xff] 0.0
          %376 = vst [vmem:[#allocation6 + $0x38] sm:$0xff] 0.0
          %377 = vst [vmem:[#allocation6 + $0x40] sm:$0xff] 0.0
          %378 = vst [vmem:[#allocation6 + $0x48] sm:$0xff] 0.0
          %379 = vst [vmem:[#allocation6 + $0x50] sm:$0xff] 0.0
          %380 = vst [vmem:[#allocation6 + $0x58] sm:$0xff] 0.0
          %381 = vst [vmem:[#allocation6 + $0x60] sm:$0xff] 0.0
          %382 = vst [vmem:[#allocation6 + $0x68] sm:$0xff] 0.0
          %383 = vst [vmem:[#allocation6 + $0x70] sm:$0xff] 0.0
          %384 = vst [vmem:[#allocation6 + $0x78] sm:$0xff] 0.0
          %385 = vst [vmem:[#allocation7] sm:$0xff] 0.0
          %386 = vst [vmem:[#allocation7 + $0x8] sm:$0xff] 0.0
          %387 = vst [vmem:[#allocation7 + $0x10] sm:$0xff] 0.0
          %388 = vst [vmem:[#allocation7 + $0x18] sm:$0xff] 0.0
          %389 = vst [vmem:[#allocation7 + $0x20] sm:$0xff] 0.0
          %390 = vst [vmem:[#allocation7 + $0x28] sm:$0xff] 0.0
          %391 = vst [vmem:[#allocation7 + $0x30] sm:$0xff] 0.0
          %392 = vst [vmem:[#allocation7 + $0x38] sm:$0xff] 0.0
          %393 = vst [vmem:[#allocation7 + $0x40] sm:$0xff] 0.0
          %394 = vst [vmem:[#allocation7 + $0x48] sm:$0xff] 0.0
          %395 = vst [vmem:[#allocation7 + $0x50] sm:$0xff] 0.0
          %396 = vst [vmem:[#allocation7 + $0x58] sm:$0xff] 0.0
          %397 = vst [vmem:[#allocation7 + $0x60] sm:$0xff] 0.0
          %398 = vst [vmem:[#allocation7 + $0x68] sm:$0xff] 0.0
          %399 = vst [vmem:[#allocation7 + $0x70] sm:$0xff] 0.0
          %400 = vst [vmem:[#allocation7 + $0x78] sm:$0xff] 0.0
          %v401 = vld [vmem:[%s251] sm:$0xff]
          %v402 = vld [vmem:[%s251 + $0x8] sm:$0xff]
          %v403 = vld [vmem:[%s251 + $0x10] sm:$0xff]
          %v404 = vld [vmem:[%s251 + $0x18] sm:$0xff]
          %v405 = vld [vmem:[%s251 + $0x20] sm:$0xff]
          %v406 = vld [vmem:[%s251 + $0x28] sm:$0xff]
          %v407 = vld [vmem:[%s251 + $0x30] sm:$0xff]
          %v408 = vld [vmem:[%s251 + $0x38] sm:$0xff]
          %v409 = vld [vmem:[%s251 + $0x40] sm:$0xff]
          %v410 = vld [vmem:[%s251 + $0x48] sm:$0xff]
          %v411 = vld [vmem:[%s251 + $0x50] sm:$0xff]
          %v412 = vld [vmem:[%s251 + $0x58] sm:$0xff]
          %v413 = vld [vmem:[%s251 + $0x60] sm:$0xff]
          %v414 = vld [vmem:[%s251 + $0x68] sm:$0xff]
          %v415 = vld [vmem:[%s251 + $0x70] sm:$0xff]
          %v416 = vld [vmem:[%s251 + $0x78] sm:$0xff]
          %v417 = vld [vmem:[%s260] sm:$0xff]
          %v418 = vld [vmem:[%s260 + $0x8] sm:$0xff]
          %v419 = vld [vmem:[%s260 + $0x10] sm:$0xff]
          %v420 = vld [vmem:[%s260 + $0x18] sm:$0xff]
          %v421 = vld [vmem:[%s260 + $0x20] sm:$0xff]
          %v422 = vld [vmem:[%s260 + $0x28] sm:$0xff]
          %v423 = vld [vmem:[%s260 + $0x30] sm:$0xff]
          %v424 = vld [vmem:[%s260 + $0x38] sm:$0xff]
          %v425 = vld [vmem:[%s260 + $0x40] sm:$0xff]
          %v426 = vld [vmem:[%s260 + $0x48] sm:$0xff]
          %v427 = vld [vmem:[%s260 + $0x50] sm:$0xff]
          %v428 = vld [vmem:[%s260 + $0x58] sm:$0xff]
          %v429 = vld [vmem:[%s260 + $0x60] sm:$0xff]
          %v430 = vld [vmem:[%s260 + $0x68] sm:$0xff]
          %v431 = vld [vmem:[%s260 + $0x70] sm:$0xff]
          %v432 = vld [vmem:[%s260 + $0x78] sm:$0xff]
          %433 = vadd.xlane.f32.xlu0 %v401
          %v434 = vpop.xlane.xlu0 %433
          %435 = vadd.xlane.f32.xlu0 %v402
          %v436 = vpop.xlane.xlu0 %435
          %437 = vadd.xlane.f32.xlu0 %v403
          %v438 = vpop.xlane.xlu0 %437
          %439 = vadd.xlane.f32.xlu0 %v404
          %v440 = vpop.xlane.xlu0 %439
          %441 = vadd.xlane.f32.xlu0 %v405
          %v442 = vpop.xlane.xlu0 %441
          %443 = vadd.xlane.f32.xlu0 %v406
          %v444 = vpop.xlane.xlu0 %443
          %445 = vadd.xlane.f32.xlu0 %v407
          %v446 = vpop.xlane.xlu0 %445
          %447 = vadd.xlane.f32.xlu0 %v408
          %v448 = vpop.xlane.xlu0 %447
          %449 = vadd.xlane.f32.xlu0 %v409
          %v450 = vpop.xlane.xlu0 %449
          %451 = vadd.xlane.f32.xlu0 %v410
          %v452 = vpop.xlane.xlu0 %451
          %453 = vadd.xlane.f32.xlu0 %v411
          %v454 = vpop.xlane.xlu0 %453
          %455 = vadd.xlane.f32.xlu0 %v412
          %v456 = vpop.xlane.xlu0 %455
          %457 = vadd.xlane.f32.xlu0 %v413
          %v458 = vpop.xlane.xlu0 %457
          %459 = vadd.xlane.f32.xlu0 %v414
          %v460 = vpop.xlane.xlu0 %459
          %461 = vadd.xlane.f32.xlu0 %v415
          %v462 = vpop.xlane.xlu0 %461
          %463 = vadd.xlane.f32.xlu0 %v416
          %v464 = vpop.xlane.xlu0 %463
          %v465 = vmul.f32 %v434, 0.0078125
          %v466 = vmul.f32 %v436, 0.0078125
          %v467 = vmul.f32 %v438, 0.0078125
          %v468 = vmul.f32 %v440, 0.0078125
          %v469 = vmul.f32 %v442, 0.0078125
          %v470 = vmul.f32 %v444, 0.0078125
          %v471 = vmul.f32 %v446, 0.0078125
          %v472 = vmul.f32 %v448, 0.0078125
          %v473 = vmul.f32 %v450, 0.0078125
          %v474 = vmul.f32 %v452, 0.0078125
          %v475 = vmul.f32 %v454, 0.0078125
          %v476 = vmul.f32 %v456, 0.0078125
          %v477 = vmul.f32 %v458, 0.0078125
          %v478 = vmul.f32 %v460, 0.0078125
          %v479 = vmul.f32 %v462, 0.0078125
          %v480 = vmul.f32 %v464, 0.0078125
          %481 = vadd.xlane.f32.xlu0 %v417
          %v482 = vpop.xlane.xlu0 %481
          %483 = vadd.xlane.f32.xlu0 %v418
          %v484 = vpop.xlane.xlu0 %483
          %485 = vadd.xlane.f32.xlu0 %v419
          %v486 = vpop.xlane.xlu0 %485
          %487 = vadd.xlane.f32.xlu0 %v420
          %v488 = vpop.xlane.xlu0 %487
          %489 = vadd.xlane.f32.xlu0 %v421
          %v490 = vpop.xlane.xlu0 %489
          %491 = vadd.xlane.f32.xlu0 %v422
          %v492 = vpop.xlane.xlu0 %491
          %493 = vadd.xlane.f32.xlu0 %v423
          %v494 = vpop.xlane.xlu0 %493
          %495 = vadd.xlane.f32.xlu0 %v424
          %v496 = vpop.xlane.xlu0 %495
          %497 = vadd.xlane.f32.xlu0 %v425
          %v498 = vpop.xlane.xlu0 %497
          %499 = vadd.xlane.f32.xlu0 %v426
          %v500 = vpop.xlane.xlu0 %499
          %501 = vadd.xlane.f32.xlu0 %v427
          %v502 = vpop.xlane.xlu0 %501
          %503 = vadd.xlane.f32.xlu0 %v428
          %v504 = vpop.xlane.xlu0 %503
          %505 = vadd.xlane.f32.xlu0 %v429
          %v506 = vpop.xlane.xlu0 %505
          %507 = vadd.xlane.f32.xlu0 %v430
          %v508 = vpop.xlane.xlu0 %507
          %509 = vadd.xlane.f32.xlu0 %v431
          %v510 = vpop.xlane.xlu0 %509
          %511 = vadd.xlane.f32.xlu0 %v432
          %v512 = vpop.xlane.xlu0 %511
          %v513 = vmul.f32 %v482, 0.0078125
          %v514 = vmul.f32 %v484, 0.0078125
          %v515 = vmul.f32 %v486, 0.0078125
          %v516 = vmul.f32 %v488, 0.0078125
          %v517 = vmul.f32 %v490, 0.0078125
          %v518 = vmul.f32 %v492, 0.0078125
          %v519 = vmul.f32 %v494, 0.0078125
          %v520 = vmul.f32 %v496, 0.0078125
          %v521 = vmul.f32 %v498, 0.0078125
          %v522 = vmul.f32 %v500, 0.0078125
          %v523 = vmul.f32 %v502, 0.0078125
          %v524 = vmul.f32 %v504, 0.0078125
          %v525 = vmul.f32 %v506, 0.0078125
          %v526 = vmul.f32 %v508, 0.0078125
          %v527 = vmul.f32 %v510, 0.0078125
          %v528 = vmul.f32 %v512, 0.0078125
          %529 = vst [vmem:[#allocation8] sm:$0xff] %v465
          %530 = vst [vmem:[#allocation8 + $0x8] sm:$0xff] %v466
          %531 = vst [vmem:[#allocation8 + $0x10] sm:$0xff] %v467
          %532 = vst [vmem:[#allocation8 + $0x18] sm:$0xff] %v468
          %533 = vst [vmem:[#allocation8 + $0x20] sm:$0xff] %v469
          %534 = vst [vmem:[#allocation8 + $0x28] sm:$0xff] %v470
          %535 = vst [vmem:[#allocation8 + $0x30] sm:$0xff] %v471
          %536 = vst [vmem:[#allocation8 + $0x38] sm:$0xff] %v472
          %537 = vst [vmem:[#allocation8 + $0x40] sm:$0xff] %v473
          %538 = vst [vmem:[#allocation8 + $0x48] sm:$0xff] %v474
          %539 = vst [vmem:[#allocation8 + $0x50] sm:$0xff] %v475
          %540 = vst [vmem:[#allocation8 + $0x58] sm:$0xff] %v476
          %541 = vst [vmem:[#allocation8 + $0x60] sm:$0xff] %v477
          %542 = vst [vmem:[#allocation8 + $0x68] sm:$0xff] %v478
          %543 = vst [vmem:[#allocation8 + $0x70] sm:$0xff] %v479
          %544 = vst [vmem:[#allocation8 + $0x78] sm:$0xff] %v480
          %545 = vst [vmem:[#allocation9] sm:$0xff] %v513
          %546 = vst [vmem:[#allocation9 + $0x8] sm:$0xff] %v514
          %547 = vst [vmem:[#allocation9 + $0x10] sm:$0xff] %v515
          %548 = vst [vmem:[#allocation9 + $0x18] sm:$0xff] %v516
          %549 = vst [vmem:[#allocation9 + $0x20] sm:$0xff] %v517
          %550 = vst [vmem:[#allocation9 + $0x28] sm:$0xff] %v518
          %551 = vst [vmem:[#allocation9 + $0x30] sm:$0xff] %v519
          %552 = vst [vmem:[#allocation9 + $0x38] sm:$0xff] %v520
          %553 = vst [vmem:[#allocation9 + $0x40] sm:$0xff] %v521
          %554 = vst [vmem:[#allocation9 + $0x48] sm:$0xff] %v522
          %555 = vst [vmem:[#allocation9 + $0x50] sm:$0xff] %v523
          %556 = vst [vmem:[#allocation9 + $0x58] sm:$0xff] %v524
          %557 = vst [vmem:[#allocation9 + $0x60] sm:$0xff] %v525
          %558 = vst [vmem:[#allocation9 + $0x68] sm:$0xff] %v526
          %559 = vst [vmem:[#allocation9 + $0x70] sm:$0xff] %v527
          %560 = vst [vmem:[#allocation9 + $0x78] sm:$0xff] %v528
        $region40: #{tpu_custom_call.1} parent=27 // pred_fallthru
          _
        loop: start=0, step=1, limit=16
        $region41: #{tpu_custom_call.1} parent=27 // loop_pre_header
          _
        $region42: #{tpu_custom_call.1} parent=27 // loop_header
          %s562 = sphi 0, %s566
          %p563 = scmp.ge.s32.totalorder %s562, 16
        $region43: #{tpu_custom_call.1} parent=27 // loop_header_branch
          %565 = sbr.rel (%p563) target = $region47
        $region44: #{tpu_custom_call.1} parent=27 // loop_body
          %s567 = smul.u32 %s562, 8
          %s568 = scalar_lea.vmem [#allocation8], %s567
          %v569 = vld [vmem:[%s568] sm:$0xff]
          %s570 = scalar_lea.vmem [#allocation9], %s567
          %v571 = vld [vmem:[%s570] sm:$0xff]
          %s572 = scalar_lea.vmem %s251, %s567 [#allocation10]
          %v573 = vld [vmem:[%s572] sm:$0xff]
          %s574 = scalar_lea.vmem %s260, %s567 [#allocation12]
          %v575 = vld [vmem:[%s574] sm:$0xff]
          %v576 = vsub.f32 %v573, %v569
          %v577 = vsub.f32 %v575, %v571
          %v578 = vadd.f32 %v576, 0.0
          %v579 = vadd.f32 %v577, 0.0
          %v580 = vmul.f32 %v576, %v576
          %v581 = vadd.f32 %v580, 0.0
          %v582 = vmul.f32 %v577, %v577
          %v583 = vadd.f32 %v582, 0.0
          %v584 = vmul.f32 %v576, %v577
          %v585 = vadd.f32 %v584, 0.0
          %v586 = vadd.f32 %v573, 1.1920929e-07
          %v587 = vadd.f32 %v575, 1.1920929e-07
          %v588 = vlog2.pop %v587
          %v589 = vmul.f32 %v588, 0.6931472
          %v590 = vmul.f32 %v586, %v589
          %v591 = vadd.f32 %v590, 0.0
          %s592 = sadd.s32 %s567, 128
          %s593 = scalar_lea.vmem %s251, %s592 [#allocation10]
          %v594 = vld [vmem:[%s593] sm:$0xff]
          %s595 = scalar_lea.vmem %s260, %s592 [#allocation12]
          %v596 = vld [vmem:[%s595] sm:$0xff]
          %v597 = vsub.f32 %v594, %v569
          %v598 = vsub.f32 %v596, %v571
          %v599 = vadd.f32 %v578, %v597
          %v600 = vadd.f32 %v579, %v598
          %v601 = vmul.f32 %v597, %v597
          %v602 = vadd.f32 %v581, %v601
          %v603 = vmul.f32 %v598, %v598
          %v604 = vadd.f32 %v583, %v603
          %v605 = vmul.f32 %v597, %v598
          %v606 = vadd.f32 %v585, %v605
          %v607 = vadd.f32 %v594, 1.1920929e-07
          %v608 = vadd.f32 %v596, 1.1920929e-07
          %v609 = vlog2.pop %v608
          %v610 = vmul.f32 %v609, 0.6931472
          %v611 = vmul.f32 %v607, %v610
          %v612 = vadd.f32 %v591, %v611
          %s613 = scalar_lea.vmem [#allocation2], %s567
          %v614 = vld [vmem:[%s613] sm:$0xff]
          %v615 = vadd.f32 %v614, %v599
          %616 = vst [vmem:[%s613] sm:$0xff] %v615
          %s617 = scalar_lea.vmem [#allocation3], %s567
          %v618 = vld [vmem:[%s617] sm:$0xff]
          %v619 = vadd.f32 %v618, %v600
          %620 = vst [vmem:[%s617] sm:$0xff] %v619
          %s621 = scalar_lea.vmem [#allocation4], %s567
          %v622 = vld [vmem:[%s621] sm:$0xff]
          %v623 = vadd.f32 %v622, %v602
          %624 = vst [vmem:[%s621] sm:$0xff] %v623
          %s625 = scalar_lea.vmem [#allocation5], %s567
          %v626 = vld [vmem:[%s625] sm:$0xff]
          %v627 = vadd.f32 %v626, %v604
          %628 = vst [vmem:[%s625] sm:$0xff] %v627
          %s629 = scalar_lea.vmem [#allocation6], %s567
          %v630 = vld [vmem:[%s629] sm:$0xff]
          %v631 = vadd.f32 %v630, %v606
          %632 = vst [vmem:[%s629] sm:$0xff] %v631
          %s633 = scalar_lea.vmem [#allocation7], %s567
          %v634 = vld [vmem:[%s633] sm:$0xff]
          %v635 = vadd.f32 %v634, %v612
          %636 = vst [vmem:[%s633] sm:$0xff] %v635
        $region45: #{tpu_custom_call.1} parent=27 // loop_footer
          %s566 = sadd.s32 1, %s562
        $region46: #{tpu_custom_call.1} parent=27 // loop_footer_branch
          %561 = sbr.rel target = $region42
        $region47: #{tpu_custom_call.1} parent=27 // loop_exit
          _
        // Predicated region
        $region48: #{tpu_custom_call.1} parent=27 // pred_check
          _
        $region49: #{tpu_custom_call.1} parent=27 // pred_check_branch
          %638 = sbr.rel (%p301) target = $region51
        $region50: #{tpu_custom_call.1} parent=27 // pred_region
          %v639 = vld [vmem:[#allocation2] sm:$0xff]
          %v640 = vld [vmem:[#allocation2 + $0x8] sm:$0xff]
          %v641 = vld [vmem:[#allocation2 + $0x10] sm:$0xff]
          %v642 = vld [vmem:[#allocation2 + $0x18] sm:$0xff]
          %v643 = vld [vmem:[#allocation2 + $0x20] sm:$0xff]
          %v644 = vld [vmem:[#allocation2 + $0x28] sm:$0xff]
          %v645 = vld [vmem:[#allocation2 + $0x30] sm:$0xff]
          %v646 = vld [vmem:[#allocation2 + $0x38] sm:$0xff]
          %v647 = vld [vmem:[#allocation2 + $0x40] sm:$0xff]
          %v648 = vld [vmem:[#allocation2 + $0x48] sm:$0xff]
          %v649 = vld [vmem:[#allocation2 + $0x50] sm:$0xff]
          %v650 = vld [vmem:[#allocation2 + $0x58] sm:$0xff]
          %v651 = vld [vmem:[#allocation2 + $0x60] sm:$0xff]
          %v652 = vld [vmem:[#allocation2 + $0x68] sm:$0xff]
          %v653 = vld [vmem:[#allocation2 + $0x70] sm:$0xff]
          %v654 = vld [vmem:[#allocation2 + $0x78] sm:$0xff]
          %655 = vadd.xlane.f32.xlu0 %v639
          %v656 = vpop.xlane.xlu0 %655
          %657 = vadd.xlane.f32.xlu0 %v640
          %v658 = vpop.xlane.xlu0 %657
          %659 = vadd.xlane.f32.xlu0 %v641
          %v660 = vpop.xlane.xlu0 %659
          %661 = vadd.xlane.f32.xlu0 %v642
          %v662 = vpop.xlane.xlu0 %661
          %663 = vadd.xlane.f32.xlu0 %v643
          %v664 = vpop.xlane.xlu0 %663
          %665 = vadd.xlane.f32.xlu0 %v644
          %v666 = vpop.xlane.xlu0 %665
          %667 = vadd.xlane.f32.xlu0 %v645
          %v668 = vpop.xlane.xlu0 %667
          %669 = vadd.xlane.f32.xlu0 %v646
          %v670 = vpop.xlane.xlu0 %669
          %671 = vadd.xlane.f32.xlu0 %v647
          %v672 = vpop.xlane.xlu0 %671
          %673 = vadd.xlane.f32.xlu0 %v648
          %v674 = vpop.xlane.xlu0 %673
          %675 = vadd.xlane.f32.xlu0 %v649
          %v676 = vpop.xlane.xlu0 %675
          %677 = vadd.xlane.f32.xlu0 %v650
          %v678 = vpop.xlane.xlu0 %677
          %679 = vadd.xlane.f32.xlu0 %v651
          %v680 = vpop.xlane.xlu0 %679
          %681 = vadd.xlane.f32.xlu0 %v652
          %v682 = vpop.xlane.xlu0 %681
          %683 = vadd.xlane.f32.xlu0 %v653
          %v684 = vpop.xlane.xlu0 %683
          %685 = vadd.xlane.f32.xlu0 %v654
          %v686 = vpop.xlane.xlu0 %685
          %v687 = vld [vmem:[#allocation3] sm:$0xff]
          %v688 = vld [vmem:[#allocation3 + $0x8] sm:$0xff]
          %v689 = vld [vmem:[#allocation3 + $0x10] sm:$0xff]
          %v690 = vld [vmem:[#allocation3 + $0x18] sm:$0xff]
          %v691 = vld [vmem:[#allocation3 + $0x20] sm:$0xff]
          %v692 = vld [vmem:[#allocation3 + $0x28] sm:$0xff]
          %v693 = vld [vmem:[#allocation3 + $0x30] sm:$0xff]
          %v694 = vld [vmem:[#allocation3 + $0x38] sm:$0xff]
          %v695 = vld [vmem:[#allocation3 + $0x40] sm:$0xff]
          %v696 = vld [vmem:[#allocation3 + $0x48] sm:$0xff]
          %v697 = vld [vmem:[#allocation3 + $0x50] sm:$0xff]
          %v698 = vld [vmem:[#allocation3 + $0x58] sm:$0xff]
          %v699 = vld [vmem:[#allocation3 + $0x60] sm:$0xff]
          %v700 = vld [vmem:[#allocation3 + $0x68] sm:$0xff]
          %v701 = vld [vmem:[#allocation3 + $0x70] sm:$0xff]
          %v702 = vld [vmem:[#allocation3 + $0x78] sm:$0xff]
          %703 = vadd.xlane.f32.xlu0 %v687
          %v704 = vpop.xlane.xlu0 %703
          %705 = vadd.xlane.f32.xlu0 %v688
          %v706 = vpop.xlane.xlu0 %705
          %707 = vadd.xlane.f32.xlu0 %v689
          %v708 = vpop.xlane.xlu0 %707
          %709 = vadd.xlane.f32.xlu0 %v690
          %v710 = vpop.xlane.xlu0 %709
          %711 = vadd.xlane.f32.xlu0 %v691
          %v712 = vpop.xlane.xlu0 %711
          %713 = vadd.xlane.f32.xlu0 %v692
          %v714 = vpop.xlane.xlu0 %713
          %715 = vadd.xlane.f32.xlu0 %v693
          %v716 = vpop.xlane.xlu0 %715
          %717 = vadd.xlane.f32.xlu0 %v694
          %v718 = vpop.xlane.xlu0 %717
          %719 = vadd.xlane.f32.xlu0 %v695
          %v720 = vpop.xlane.xlu0 %719
          %721 = vadd.xlane.f32.xlu0 %v696
          %v722 = vpop.xlane.xlu0 %721
          %723 = vadd.xlane.f32.xlu0 %v697
          %v724 = vpop.xlane.xlu0 %723
          %725 = vadd.xlane.f32.xlu0 %v698
          %v726 = vpop.xlane.xlu0 %725
          %727 = vadd.xlane.f32.xlu0 %v699
          %v728 = vpop.xlane.xlu0 %727
          %729 = vadd.xlane.f32.xlu0 %v700
          %v730 = vpop.xlane.xlu0 %729
          %731 = vadd.xlane.f32.xlu0 %v701
          %v732 = vpop.xlane.xlu0 %731
          %733 = vadd.xlane.f32.xlu0 %v702
          %v734 = vpop.xlane.xlu0 %733
          %v735 = vld [vmem:[#allocation4] sm:$0xff]
          %v736 = vld [vmem:[#allocation4 + $0x8] sm:$0xff]
          %v737 = vld [vmem:[#allocation4 + $0x10] sm:$0xff]
          %v738 = vld [vmem:[#allocation4 + $0x18] sm:$0xff]
          %v739 = vld [vmem:[#allocation4 + $0x20] sm:$0xff]
          %v740 = vld [vmem:[#allocation4 + $0x28] sm:$0xff]
          %v741 = vld [vmem:[#allocation4 + $0x30] sm:$0xff]
          %v742 = vld [vmem:[#allocation4 + $0x38] sm:$0xff]
          %v743 = vld [vmem:[#allocation4 + $0x40] sm:$0xff]
          %v744 = vld [vmem:[#allocation4 + $0x48] sm:$0xff]
          %v745 = vld [vmem:[#allocation4 + $0x50] sm:$0xff]
          %v746 = vld [vmem:[#allocation4 + $0x58] sm:$0xff]
          %v747 = vld [vmem:[#allocation4 + $0x60] sm:$0xff]
          %v748 = vld [vmem:[#allocation4 + $0x68] sm:$0xff]
          %v749 = vld [vmem:[#allocation4 + $0x70] sm:$0xff]
          %v750 = vld [vmem:[#allocation4 + $0x78] sm:$0xff]
          %751 = vadd.xlane.f32.xlu0 %v735
          %v752 = vpop.xlane.xlu0 %751
          %753 = vadd.xlane.f32.xlu0 %v736
          %v754 = vpop.xlane.xlu0 %753
          %755 = vadd.xlane.f32.xlu0 %v737
          %v756 = vpop.xlane.xlu0 %755
          %757 = vadd.xlane.f32.xlu0 %v738
          %v758 = vpop.xlane.xlu0 %757
          %759 = vadd.xlane.f32.xlu0 %v739
          %v760 = vpop.xlane.xlu0 %759
          %761 = vadd.xlane.f32.xlu0 %v740
          %v762 = vpop.xlane.xlu0 %761
          %763 = vadd.xlane.f32.xlu0 %v741
          %v764 = vpop.xlane.xlu0 %763
          %765 = vadd.xlane.f32.xlu0 %v742
          %v766 = vpop.xlane.xlu0 %765
          %767 = vadd.xlane.f32.xlu0 %v743
          %v768 = vpop.xlane.xlu0 %767
          %769 = vadd.xlane.f32.xlu0 %v744
          %v770 = vpop.xlane.xlu0 %769
          %771 = vadd.xlane.f32.xlu0 %v745
          %v772 = vpop.xlane.xlu0 %771
          %773 = vadd.xlane.f32.xlu0 %v746
          %v774 = vpop.xlane.xlu0 %773
          %775 = vadd.xlane.f32.xlu0 %v747
          %v776 = vpop.xlane.xlu0 %775
          %777 = vadd.xlane.f32.xlu0 %v748
          %v778 = vpop.xlane.xlu0 %777
          %779 = vadd.xlane.f32.xlu0 %v749
          %v780 = vpop.xlane.xlu0 %779
          %781 = vadd.xlane.f32.xlu0 %v750
          %v782 = vpop.xlane.xlu0 %781
          %v783 = vld [vmem:[#allocation5] sm:$0xff]
          %v784 = vld [vmem:[#allocation5 + $0x8] sm:$0xff]
          %v785 = vld [vmem:[#allocation5 + $0x10] sm:$0xff]
          %v786 = vld [vmem:[#allocation5 + $0x18] sm:$0xff]
          %v787 = vld [vmem:[#allocation5 + $0x20] sm:$0xff]
          %v788 = vld [vmem:[#allocation5 + $0x28] sm:$0xff]
          %v789 = vld [vmem:[#allocation5 + $0x30] sm:$0xff]
          %v790 = vld [vmem:[#allocation5 + $0x38] sm:$0xff]
          %v791 = vld [vmem:[#allocation5 + $0x40] sm:$0xff]
          %v792 = vld [vmem:[#allocation5 + $0x48] sm:$0xff]
          %v793 = vld [vmem:[#allocation5 + $0x50] sm:$0xff]
          %v794 = vld [vmem:[#allocation5 + $0x58] sm:$0xff]
          %v795 = vld [vmem:[#allocation5 + $0x60] sm:$0xff]
          %v796 = vld [vmem:[#allocation5 + $0x68] sm:$0xff]
          %v797 = vld [vmem:[#allocation5 + $0x70] sm:$0xff]
          %v798 = vld [vmem:[#allocation5 + $0x78] sm:$0xff]
          %799 = vadd.xlane.f32.xlu0 %v783
          %v800 = vpop.xlane.xlu0 %799
          %801 = vadd.xlane.f32.xlu0 %v784
          %v802 = vpop.xlane.xlu0 %801
          %803 = vadd.xlane.f32.xlu0 %v785
          %v804 = vpop.xlane.xlu0 %803
          %805 = vadd.xlane.f32.xlu0 %v786
          %v806 = vpop.xlane.xlu0 %805
          %807 = vadd.xlane.f32.xlu0 %v787
          %v808 = vpop.xlane.xlu0 %807
          %809 = vadd.xlane.f32.xlu0 %v788
          %v810 = vpop.xlane.xlu0 %809
          %811 = vadd.xlane.f32.xlu0 %v789
          %v812 = vpop.xlane.xlu0 %811
          %813 = vadd.xlane.f32.xlu0 %v790
          %v814 = vpop.xlane.xlu0 %813
          %815 = vadd.xlane.f32.xlu0 %v791
          %v816 = vpop.xlane.xlu0 %815
          %817 = vadd.xlane.f32.xlu0 %v792
          %v818 = vpop.xlane.xlu0 %817
          %819 = vadd.xlane.f32.xlu0 %v793
          %v820 = vpop.xlane.xlu0 %819
          %821 = vadd.xlane.f32.xlu0 %v794
          %v822 = vpop.xlane.xlu0 %821
          %823 = vadd.xlane.f32.xlu0 %v795
          %v824 = vpop.xlane.xlu0 %823
          %825 = vadd.xlane.f32.xlu0 %v796
          %v826 = vpop.xlane.xlu0 %825
          %827 = vadd.xlane.f32.xlu0 %v797
          %v828 = vpop.xlane.xlu0 %827
          %829 = vadd.xlane.f32.xlu0 %v798
          %v830 = vpop.xlane.xlu0 %829
          %v831 = vld [vmem:[#allocation6] sm:$0xff]
          %v832 = vld [vmem:[#allocation6 + $0x8] sm:$0xff]
          %v833 = vld [vmem:[#allocation6 + $0x10] sm:$0xff]
          %v834 = vld [vmem:[#allocation6 + $0x18] sm:$0xff]
          %v835 = vld [vmem:[#allocation6 + $0x20] sm:$0xff]
          %v836 = vld [vmem:[#allocation6 + $0x28] sm:$0xff]
          %v837 = vld [vmem:[#allocation6 + $0x30] sm:$0xff]
          %v838 = vld [vmem:[#allocation6 + $0x38] sm:$0xff]
          %v839 = vld [vmem:[#allocation6 + $0x40] sm:$0xff]
          %v840 = vld [vmem:[#allocation6 + $0x48] sm:$0xff]
          %v841 = vld [vmem:[#allocation6 + $0x50] sm:$0xff]
          %v842 = vld [vmem:[#allocation6 + $0x58] sm:$0xff]
          %v843 = vld [vmem:[#allocation6 + $0x60] sm:$0xff]
          %v844 = vld [vmem:[#allocation6 + $0x68] sm:$0xff]
          %v845 = vld [vmem:[#allocation6 + $0x70] sm:$0xff]
          %v846 = vld [vmem:[#allocation6 + $0x78] sm:$0xff]
          %847 = vadd.xlane.f32.xlu0 %v831
          %v848 = vpop.xlane.xlu0 %847
          %849 = vadd.xlane.f32.xlu0 %v832
          %v850 = vpop.xlane.xlu0 %849
          %851 = vadd.xlane.f32.xlu0 %v833
          %v852 = vpop.xlane.xlu0 %851
          %853 = vadd.xlane.f32.xlu0 %v834
          %v854 = vpop.xlane.xlu0 %853
          %855 = vadd.xlane.f32.xlu0 %v835
          %v856 = vpop.xlane.xlu0 %855
          %857 = vadd.xlane.f32.xlu0 %v836
          %v858 = vpop.xlane.xlu0 %857
          %859 = vadd.xlane.f32.xlu0 %v837
          %v860 = vpop.xlane.xlu0 %859
          %861 = vadd.xlane.f32.xlu0 %v838
          %v862 = vpop.xlane.xlu0 %861
          %863 = vadd.xlane.f32.xlu0 %v839
          %v864 = vpop.xlane.xlu0 %863
          %865 = vadd.xlane.f32.xlu0 %v840
          %v866 = vpop.xlane.xlu0 %865
          %867 = vadd.xlane.f32.xlu0 %v841
          %v868 = vpop.xlane.xlu0 %867
          %869 = vadd.xlane.f32.xlu0 %v842
          %v870 = vpop.xlane.xlu0 %869
          %871 = vadd.xlane.f32.xlu0 %v843
          %v872 = vpop.xlane.xlu0 %871
          %873 = vadd.xlane.f32.xlu0 %v844
          %v874 = vpop.xlane.xlu0 %873
          %875 = vadd.xlane.f32.xlu0 %v845
          %v876 = vpop.xlane.xlu0 %875
          %877 = vadd.xlane.f32.xlu0 %v846
          %v878 = vpop.xlane.xlu0 %877
          %v879 = vld [vmem:[#allocation7] sm:$0xff]
          %v880 = vld [vmem:[#allocation7 + $0x8] sm:$0xff]
          %v881 = vld [vmem:[#allocation7 + $0x10] sm:$0xff]
          %v882 = vld [vmem:[#allocation7 + $0x18] sm:$0xff]
          %v883 = vld [vmem:[#allocation7 + $0x20] sm:$0xff]
          %v884 = vld [vmem:[#allocation7 + $0x28] sm:$0xff]
          %v885 = vld [vmem:[#allocation7 + $0x30] sm:$0xff]
          %v886 = vld [vmem:[#allocation7 + $0x38] sm:$0xff]
          %v887 = vld [vmem:[#allocation7 + $0x40] sm:$0xff]
          %v888 = vld [vmem:[#allocation7 + $0x48] sm:$0xff]
          %v889 = vld [vmem:[#allocation7 + $0x50] sm:$0xff]
          %v890 = vld [vmem:[#allocation7 + $0x58] sm:$0xff]
          %v891 = vld [vmem:[#allocation7 + $0x60] sm:$0xff]
          %v892 = vld [vmem:[#allocation7 + $0x68] sm:$0xff]
          %v893 = vld [vmem:[#allocation7 + $0x70] sm:$0xff]
          %v894 = vld [vmem:[#allocation7 + $0x78] sm:$0xff]
          %895 = vadd.xlane.f32.xlu0 %v879
          %v896 = vpop.xlane.xlu0 %895
          %897 = vadd.xlane.f32.xlu0 %v880
          %v898 = vpop.xlane.xlu0 %897
          %899 = vadd.xlane.f32.xlu0 %v881
          %v900 = vpop.xlane.xlu0 %899
          %901 = vadd.xlane.f32.xlu0 %v882
          %v902 = vpop.xlane.xlu0 %901
          %903 = vadd.xlane.f32.xlu0 %v883
          %v904 = vpop.xlane.xlu0 %903
          %905 = vadd.xlane.f32.xlu0 %v884
          %v906 = vpop.xlane.xlu0 %905
          %907 = vadd.xlane.f32.xlu0 %v885
          %v908 = vpop.xlane.xlu0 %907
          %909 = vadd.xlane.f32.xlu0 %v886
          %v910 = vpop.xlane.xlu0 %909
          %911 = vadd.xlane.f32.xlu0 %v887
          %v912 = vpop.xlane.xlu0 %911
          %913 = vadd.xlane.f32.xlu0 %v888
          %v914 = vpop.xlane.xlu0 %913
          %915 = vadd.xlane.f32.xlu0 %v889
          %v916 = vpop.xlane.xlu0 %915
          %917 = vadd.xlane.f32.xlu0 %v890
          %v918 = vpop.xlane.xlu0 %917
          %919 = vadd.xlane.f32.xlu0 %v891
          %v920 = vpop.xlane.xlu0 %919
          %921 = vadd.xlane.f32.xlu0 %v892
          %v922 = vpop.xlane.xlu0 %921
          %923 = vadd.xlane.f32.xlu0 %v893
          %v924 = vpop.xlane.xlu0 %923
          %925 = vadd.xlane.f32.xlu0 %v894
          %v926 = vpop.xlane.xlu0 %925
          %v927 = vld [vmem:[#allocation9] sm:$0xff]
          %v928 = vld [vmem:[#allocation9 + $0x8] sm:$0xff]
          %v929 = vld [vmem:[#allocation9 + $0x10] sm:$0xff]
          %v930 = vld [vmem:[#allocation9 + $0x18] sm:$0xff]
          %v931 = vld [vmem:[#allocation9 + $0x20] sm:$0xff]
          %v932 = vld [vmem:[#allocation9 + $0x28] sm:$0xff]
          %v933 = vld [vmem:[#allocation9 + $0x30] sm:$0xff]
          %v934 = vld [vmem:[#allocation9 + $0x38] sm:$0xff]
          %v935 = vld [vmem:[#allocation9 + $0x40] sm:$0xff]
          %v936 = vld [vmem:[#allocation9 + $0x48] sm:$0xff]
          %v937 = vld [vmem:[#allocation9 + $0x50] sm:$0xff]
          %v938 = vld [vmem:[#allocation9 + $0x58] sm:$0xff]
          %v939 = vld [vmem:[#allocation9 + $0x60] sm:$0xff]
          %v940 = vld [vmem:[#allocation9 + $0x68] sm:$0xff]
          %v941 = vld [vmem:[#allocation9 + $0x70] sm:$0xff]
          %v942 = vld [vmem:[#allocation9 + $0x78] sm:$0xff]
          %v943 = vadd.f32 %v927, 1.1920929e-07
          %v944 = vadd.f32 %v928, 1.1920929e-07
          %v945 = vadd.f32 %v929, 1.1920929e-07
          %v946 = vadd.f32 %v930, 1.1920929e-07
          %v947 = vadd.f32 %v931, 1.1920929e-07
          %v948 = vadd.f32 %v932, 1.1920929e-07
          %v949 = vadd.f32 %v933, 1.1920929e-07
          %v950 = vadd.f32 %v934, 1.1920929e-07
          %v951 = vadd.f32 %v935, 1.1920929e-07
          %v952 = vadd.f32 %v936, 1.1920929e-07
          %v953 = vadd.f32 %v937, 1.1920929e-07
          %v954 = vadd.f32 %v938, 1.1920929e-07
          %v955 = vadd.f32 %v939, 1.1920929e-07
          %v956 = vadd.f32 %v940, 1.1920929e-07
          %v957 = vadd.f32 %v941, 1.1920929e-07
          %v958 = vadd.f32 %v942, 1.1920929e-07
          %v959 = vmul.f32 %v943, 512.0
          %v960 = vmul.f32 %v944, 512.0
          %v961 = vmul.f32 %v945, 512.0
          %v962 = vmul.f32 %v946, 512.0
          %v963 = vmul.f32 %v947, 512.0
          %v964 = vmul.f32 %v948, 512.0
          %v965 = vmul.f32 %v949, 512.0
          %v966 = vmul.f32 %v950, 512.0
          %v967 = vmul.f32 %v951, 512.0
          %v968 = vmul.f32 %v952, 512.0
          %v969 = vmul.f32 %v953, 512.0
          %v970 = vmul.f32 %v954, 512.0
          %v971 = vmul.f32 %v955, 512.0
          %v972 = vmul.f32 %v956, 512.0
          %v973 = vmul.f32 %v957, 512.0
          %v974 = vmul.f32 %v958, 512.0
          %v975 = vadd.f32 %v704, %v959
          %v976 = vadd.f32 %v706, %v960
          %v977 = vadd.f32 %v708, %v961
          %v978 = vadd.f32 %v710, %v962
          %v979 = vadd.f32 %v712, %v963
          %v980 = vadd.f32 %v714, %v964
          %v981 = vadd.f32 %v716, %v965
          %v982 = vadd.f32 %v718, %v966
          %v983 = vadd.f32 %v720, %v967
          %v984 = vadd.f32 %v722, %v968
          %v985 = vadd.f32 %v724, %v969
          %v986 = vadd.f32 %v726, %v970
          %v987 = vadd.f32 %v728, %v971
          %v988 = vadd.f32 %v730, %v972
          %v989 = vadd.f32 %v732, %v973
          %v990 = vadd.f32 %v734, %v974
          %v991 = vsub.f32 %v975, %v896
          %v992 = vsub.f32 %v976, %v898
          %v993 = vsub.f32 %v977, %v900
          %v994 = vsub.f32 %v978, %v902
          %v995 = vsub.f32 %v979, %v904
          %v996 = vsub.f32 %v980, %v906
          %v997 = vsub.f32 %v981, %v908
          %v998 = vsub.f32 %v982, %v910
          %v999 = vsub.f32 %v983, %v912
          %v1000 = vsub.f32 %v984, %v914
          %v1001 = vsub.f32 %v985, %v916
          %v1002 = vsub.f32 %v986, %v918
          %v1003 = vsub.f32 %v987, %v920
          %v1004 = vsub.f32 %v988, %v922
          %v1005 = vsub.f32 %v989, %v924
          %v1006 = vsub.f32 %v990, %v926
          %v1007 = vrcp.pop 512.0
          %v1008 = vmul.f32 %v656, %v1007
          %v1009 = vmul.f32 %v658, %v1007
          %v1010 = vmul.f32 %v660, %v1007
          %v1011 = vmul.f32 %v662, %v1007
          %v1012 = vmul.f32 %v664, %v1007
          %v1013 = vmul.f32 %v666, %v1007
          %v1014 = vmul.f32 %v668, %v1007
          %v1015 = vmul.f32 %v670, %v1007
          %v1016 = vmul.f32 %v672, %v1007
          %v1017 = vmul.f32 %v674, %v1007
          %v1018 = vmul.f32 %v676, %v1007
          %v1019 = vmul.f32 %v678, %v1007
          %v1020 = vmul.f32 %v680, %v1007
          %v1021 = vmul.f32 %v682, %v1007
          %v1022 = vmul.f32 %v684, %v1007
          %v1023 = vmul.f32 %v686, %v1007
          %v1024 = vmul.f32 %v704, %v1007
          %v1025 = vmul.f32 %v706, %v1007
          %v1026 = vmul.f32 %v708, %v1007
          %v1027 = vmul.f32 %v710, %v1007
          %v1028 = vmul.f32 %v712, %v1007
          %v1029 = vmul.f32 %v714, %v1007
          %v1030 = vmul.f32 %v716, %v1007
          %v1031 = vmul.f32 %v718, %v1007
          %v1032 = vmul.f32 %v720, %v1007
          %v1033 = vmul.f32 %v722, %v1007
          %v1034 = vmul.f32 %v724, %v1007
          %v1035 = vmul.f32 %v726, %v1007
          %v1036 = vmul.f32 %v728, %v1007
          %v1037 = vmul.f32 %v730, %v1007
          %v1038 = vmul.f32 %v732, %v1007
          %v1039 = vmul.f32 %v734, %v1007
          %v1040 = vmul.f32 %v1008, 512.0
          %v1041 = vmul.f32 %v1009, 512.0
          %v1042 = vmul.f32 %v1010, 512.0
          %v1043 = vmul.f32 %v1011, 512.0
          %v1044 = vmul.f32 %v1012, 512.0
          %v1045 = vmul.f32 %v1013, 512.0
          %v1046 = vmul.f32 %v1014, 512.0
          %v1047 = vmul.f32 %v1015, 512.0
          %v1048 = vmul.f32 %v1016, 512.0
          %v1049 = vmul.f32 %v1017, 512.0
          %v1050 = vmul.f32 %v1018, 512.0
          %v1051 = vmul.f32 %v1019, 512.0
          %v1052 = vmul.f32 %v1020, 512.0
          %v1053 = vmul.f32 %v1021, 512.0
          %v1054 = vmul.f32 %v1022, 512.0
          %v1055 = vmul.f32 %v1023, 512.0
          %v1056 = vmul.f32 %v1040, %v1008
          %v1057 = vmul.f32 %v1041, %v1009
          %v1058 = vmul.f32 %v1042, %v1010
          %v1059 = vmul.f32 %v1043, %v1011
          %v1060 = vmul.f32 %v1044, %v1012
          %v1061 = vmul.f32 %v1045, %v1013
          %v1062 = vmul.f32 %v1046, %v1014
          %v1063 = vmul.f32 %v1047, %v1015
          %v1064 = vmul.f32 %v1048, %v1016
          %v1065 = vmul.f32 %v1049, %v1017
          %v1066 = vmul.f32 %v1050, %v1018
          %v1067 = vmul.f32 %v1051, %v1019
          %v1068 = vmul.f32 %v1052, %v1020
          %v1069 = vmul.f32 %v1053, %v1021
          %v1070 = vmul.f32 %v1054, %v1022
          %v1071 = vmul.f32 %v1055, %v1023
          %v1072 = vsub.f32 %v752, %v1056
          %v1073 = vsub.f32 %v754, %v1057
          %v1074 = vsub.f32 %v756, %v1058
          %v1075 = vsub.f32 %v758, %v1059
          %v1076 = vsub.f32 %v760, %v1060
          %v1077 = vsub.f32 %v762, %v1061
          %v1078 = vsub.f32 %v764, %v1062
          %v1079 = vsub.f32 %v766, %v1063
          %v1080 = vsub.f32 %v768, %v1064
          %v1081 = vsub.f32 %v770, %v1065
          %v1082 = vsub.f32 %v772, %v1066
          %v1083 = vsub.f32 %v774, %v1067
          %v1084 = vsub.f32 %v776, %v1068
          %v1085 = vsub.f32 %v778, %v1069
          %v1086 = vsub.f32 %v780, %v1070
          %v1087 = vsub.f32 %v782, %v1071
          %v1088 = vmax.f32 %v1072, 0.0
          %v1089 = vmax.f32 %v1073, 0.0
          %v1090 = vmax.f32 %v1074, 0.0
          %v1091 = vmax.f32 %v1075, 0.0
          %v1092 = vmax.f32 %v1076, 0.0
          %v1093 = vmax.f32 %v1077, 0.0
          %v1094 = vmax.f32 %v1078, 0.0
          %v1095 = vmax.f32 %v1079, 0.0
          %v1096 = vmax.f32 %v1080, 0.0
          %v1097 = vmax.f32 %v1081, 0.0
          %v1098 = vmax.f32 %v1082, 0.0
          %v1099 = vmax.f32 %v1083, 0.0
          %v1100 = vmax.f32 %v1084, 0.0
          %v1101 = vmax.f32 %v1085, 0.0
          %v1102 = vmax.f32 %v1086, 0.0
          %v1103 = vmax.f32 %v1087, 0.0
          %v1104 = vmul.f32 %v1024, 512.0
          %v1105 = vmul.f32 %v1025, 512.0
          %v1106 = vmul.f32 %v1026, 512.0
          %v1107 = vmul.f32 %v1027, 512.0
          %v1108 = vmul.f32 %v1028, 512.0
          %v1109 = vmul.f32 %v1029, 512.0
          %v1110 = vmul.f32 %v1030, 512.0
          %v1111 = vmul.f32 %v1031, 512.0
          %v1112 = vmul.f32 %v1032, 512.0
          %v1113 = vmul.f32 %v1033, 512.0
          %v1114 = vmul.f32 %v1034, 512.0
          %v1115 = vmul.f32 %v1035, 512.0
          %v1116 = vmul.f32 %v1036, 512.0
          %v1117 = vmul.f32 %v1037, 512.0
          %v1118 = vmul.f32 %v1038, 512.0
          %v1119 = vmul.f32 %v1039, 512.0
          %v1120 = vmul.f32 %v1104, %v1024
          %v1121 = vmul.f32 %v1105, %v1025
          %v1122 = vmul.f32 %v1106, %v1026
          %v1123 = vmul.f32 %v1107, %v1027
          %v1124 = vmul.f32 %v1108, %v1028
          %v1125 = vmul.f32 %v1109, %v1029
          %v1126 = vmul.f32 %v1110, %v1030
          %v1127 = vmul.f32 %v1111, %v1031
          %v1128 = vmul.f32 %v1112, %v1032
          %v1129 = vmul.f32 %v1113, %v1033
          %v1130 = vmul.f32 %v1114, %v1034
          %v1131 = vmul.f32 %v1115, %v1035
          %v1132 = vmul.f32 %v1116, %v1036
          %v1133 = vmul.f32 %v1117, %v1037
          %v1134 = vmul.f32 %v1118, %v1038
          %v1135 = vmul.f32 %v1119, %v1039
          %v1136 = vsub.f32 %v800, %v1120
          %v1137 = vsub.f32 %v802, %v1121
          %v1138 = vsub.f32 %v804, %v1122
          %v1139 = vsub.f32 %v806, %v1123
          %v1140 = vsub.f32 %v808, %v1124
          %v1141 = vsub.f32 %v810, %v1125
          %v1142 = vsub.f32 %v812, %v1126
          %v1143 = vsub.f32 %v814, %v1127
          %v1144 = vsub.f32 %v816, %v1128
          %v1145 = vsub.f32 %v818, %v1129
          %v1146 = vsub.f32 %v820, %v1130
          %v1147 = vsub.f32 %v822, %v1131
          %v1148 = vsub.f32 %v824, %v1132
          %v1149 = vsub.f32 %v826, %v1133
          %v1150 = vsub.f32 %v828, %v1134
          %v1151 = vsub.f32 %v830, %v1135
          %v1152 = vmax.f32 %v1136, 0.0
          %v1153 = vmax.f32 %v1137, 0.0
          %v1154 = vmax.f32 %v1138, 0.0
          %v1155 = vmax.f32 %v1139, 0.0
          %v1156 = vmax.f32 %v1140, 0.0
          %v1157 = vmax.f32 %v1141, 0.0
          %v1158 = vmax.f32 %v1142, 0.0
          %v1159 = vmax.f32 %v1143, 0.0
          %v1160 = vmax.f32 %v1144, 0.0
          %v1161 = vmax.f32 %v1145, 0.0
          %v1162 = vmax.f32 %v1146, 0.0
          %v1163 = vmax.f32 %v1147, 0.0
          %v1164 = vmax.f32 %v1148, 0.0
          %v1165 = vmax.f32 %v1149, 0.0
          %v1166 = vmax.f32 %v1150, 0.0
          %v1167 = vmax.f32 %v1151, 0.0
          %v1168 = vrcp.pop 511.0
          %v1169 = vmul.f32 %v1088, %v1168
          %v1170 = vmul.f32 %v1089, %v1168
          %v1171 = vmul.f32 %v1090, %v1168
          %v1172 = vmul.f32 %v1091, %v1168
          %v1173 = vmul.f32 %v1092, %v1168
          %v1174 = vmul.f32 %v1093, %v1168
          %v1175 = vmul.f32 %v1094, %v1168
          %v1176 = vmul.f32 %v1095, %v1168
          %v1177 = vmul.f32 %v1096, %v1168
          %v1178 = vmul.f32 %v1097, %v1168
          %v1179 = vmul.f32 %v1098, %v1168
          %v1180 = vmul.f32 %v1099, %v1168
          %v1181 = vmul.f32 %v1100, %v1168
          %v1182 = vmul.f32 %v1101, %v1168
          %v1183 = vmul.f32 %v1102, %v1168
          %v1184 = vmul.f32 %v1103, %v1168
          %v1185 = vrsqrt.pop %v1169
          %v1186 = vmul.f32 %v1169, %v1185
          %vm1187 = vcmp.eq.f32.partialorder %v1169, inf
          %v1188 = vsel %vm1187, %v1169, %v1186
          %vm1189 = vcmp.eq.f32.partialorder %v1169, 0.0
          %v1190 = vand.u32 %v1169, 2147483648
          %v1191 = vsel %vm1189, %v1190, %v1188
          %v1192 = vrsqrt.pop %v1170
          %v1193 = vmul.f32 %v1170, %v1192
          %vm1194 = vcmp.eq.f32.partialorder %v1170, inf
          %v1195 = vsel %vm1194, %v1170, %v1193
          %vm1196 = vcmp.eq.f32.partialorder %v1170, 0.0
          %v1197 = vand.u32 %v1170, 2147483648
          %v1198 = vsel %vm1196, %v1197, %v1195
          %v1199 = vrsqrt.pop %v1171
          %v1200 = vmul.f32 %v1171, %v1199
          %vm1201 = vcmp.eq.f32.partialorder %v1171, inf
          %v1202 = vsel %vm1201, %v1171, %v1200
          %vm1203 = vcmp.eq.f32.partialorder %v1171, 0.0
          %v1204 = vand.u32 %v1171, 2147483648
          %v1205 = vsel %vm1203, %v1204, %v1202
          %v1206 = vrsqrt.pop %v1172
          %v1207 = vmul.f32 %v1172, %v1206
          %vm1208 = vcmp.eq.f32.partialorder %v1172, inf
          %v1209 = vsel %vm1208, %v1172, %v1207
          %vm1210 = vcmp.eq.f32.partialorder %v1172, 0.0
          %v1211 = vand.u32 %v1172, 2147483648
          %v1212 = vsel %vm1210, %v1211, %v1209
          %v1213 = vrsqrt.pop %v1173
          %v1214 = vmul.f32 %v1173, %v1213
          %vm1215 = vcmp.eq.f32.partialorder %v1173, inf
          %v1216 = vsel %vm1215, %v1173, %v1214
          %vm1217 = vcmp.eq.f32.partialorder %v1173, 0.0
          %v1218 = vand.u32 %v1173, 2147483648
          %v1219 = vsel %vm1217, %v1218, %v1216
          %v1220 = vrsqrt.pop %v1174
          %v1221 = vmul.f32 %v1174, %v1220
          %vm1222 = vcmp.eq.f32.partialorder %v1174, inf
          %v1223 = vsel %vm1222, %v1174, %v1221
          %vm1224 = vcmp.eq.f32.partialorder %v1174, 0.0
          %v1225 = vand.u32 %v1174, 2147483648
          %v1226 = vsel %vm1224, %v1225, %v1223
          %v1227 = vrsqrt.pop %v1175
          %v1228 = vmul.f32 %v1175, %v1227
          %vm1229 = vcmp.eq.f32.partialorder %v1175, inf
          %v1230 = vsel %vm1229, %v1175, %v1228
          %vm1231 = vcmp.eq.f32.partialorder %v1175, 0.0
          %v1232 = vand.u32 %v1175, 2147483648
          %v1233 = vsel %vm1231, %v1232, %v1230
          %v1234 = vrsqrt.pop %v1176
          %v1235 = vmul.f32 %v1176, %v1234
          %vm1236 = vcmp.eq.f32.partialorder %v1176, inf
          %v1237 = vsel %vm1236, %v1176, %v1235
          %vm1238 = vcmp.eq.f32.partialorder %v1176, 0.0
          %v1239 = vand.u32 %v1176, 2147483648
          %v1240 = vsel %vm1238, %v1239, %v1237
          %v1241 = vrsqrt.pop %v1177
          %v1242 = vmul.f32 %v1177, %v1241
          %vm1243 = vcmp.eq.f32.partialorder %v1177, inf
          %v1244 = vsel %vm1243, %v1177, %v1242
          %vm1245 = vcmp.eq.f32.partialorder %v1177, 0.0
          %v1246 = vand.u32 %v1177, 2147483648
          %v1247 = vsel %vm1245, %v1246, %v1244
          %v1248 = vrsqrt.pop %v1178
          %v1249 = vmul.f32 %v1178, %v1248
          %vm1250 = vcmp.eq.f32.partialorder %v1178, inf
          %v1251 = vsel %vm1250, %v1178, %v1249
          %vm1252 = vcmp.eq.f32.partialorder %v1178, 0.0
          %v1253 = vand.u32 %v1178, 2147483648
          %v1254 = vsel %vm1252, %v1253, %v1251
          %v1255 = vrsqrt.pop %v1179
          %v1256 = vmul.f32 %v1179, %v1255
          %vm1257 = vcmp.eq.f32.partialorder %v1179, inf
          %v1258 = vsel %vm1257, %v1179, %v1256
          %vm1259 = vcmp.eq.f32.partialorder %v1179, 0.0
          %v1260 = vand.u32 %v1179, 2147483648
          %v1261 = vsel %vm1259, %v1260, %v1258
          %v1262 = vrsqrt.pop %v1180
          %v1263 = vmul.f32 %v1180, %v1262
          %vm1264 = vcmp.eq.f32.partialorder %v1180, inf
          %v1265 = vsel %vm1264, %v1180, %v1263
          %vm1266 = vcmp.eq.f32.partialorder %v1180, 0.0
          %v1267 = vand.u32 %v1180, 2147483648
          %v1268 = vsel %vm1266, %v1267, %v1265
          %v1269 = vrsqrt.pop %v1181
          %v1270 = vmul.f32 %v1181, %v1269
          %vm1271 = vcmp.eq.f32.partialorder %v1181, inf
          %v1272 = vsel %vm1271, %v1181, %v1270
          %vm1273 = vcmp.eq.f32.partialorder %v1181, 0.0
          %v1274 = vand.u32 %v1181, 2147483648
          %v1275 = vsel %vm1273, %v1274, %v1272
          %v1276 = vrsqrt.pop %v1182
          %v1277 = vmul.f32 %v1182, %v1276
          %vm1278 = vcmp.eq.f32.partialorder %v1182, inf
          %v1279 = vsel %vm1278, %v1182, %v1277
          %vm1280 = vcmp.eq.f32.partialorder %v1182, 0.0
          %v1281 = vand.u32 %v1182, 2147483648
          %v1282 = vsel %vm1280, %v1281, %v1279
          %v1283 = vrsqrt.pop %v1183
          %v1284 = vmul.f32 %v1183, %v1283
          %vm1285 = vcmp.eq.f32.partialorder %v1183, inf
          %v1286 = vsel %vm1285, %v1183, %v1284
          %vm1287 = vcmp.eq.f32.partialorder %v1183, 0.0
          %v1288 = vand.u32 %v1183, 2147483648
          %v1289 = vsel %vm1287, %v1288, %v1286
          %v1290 = vrsqrt.pop %v1184
          %v1291 = vmul.f32 %v1184, %v1290
          %vm1292 = vcmp.eq.f32.partialorder %v1184, inf
          %v1293 = vsel %vm1292, %v1184, %v1291
          %vm1294 = vcmp.eq.f32.partialorder %v1184, 0.0
          %v1295 = vand.u32 %v1184, 2147483648
          %v1296 = vsel %vm1294, %v1295, %v1293
          %v1297 = vmul.f32 %v1152, %v1168
          %v1298 = vmul.f32 %v1153, %v1168
          %v1299 = vmul.f32 %v1154, %v1168
          %v1300 = vmul.f32 %v1155, %v1168
          %v1301 = vmul.f32 %v1156, %v1168
          %v1302 = vmul.f32 %v1157, %v1168
          %v1303 = vmul.f32 %v1158, %v1168
          %v1304 = vmul.f32 %v1159, %v1168
          %v1305 = vmul.f32 %v1160, %v1168
          %v1306 = vmul.f32 %v1161, %v1168
          %v1307 = vmul.f32 %v1162, %v1168
          %v1308 = vmul.f32 %v1163, %v1168
          %v1309 = vmul.f32 %v1164, %v1168
          %v1310 = vmul.f32 %v1165, %v1168
          %v1311 = vmul.f32 %v1166, %v1168
          %v1312 = vmul.f32 %v1167, %v1168
          %v1313 = vrsqrt.pop %v1297
          %v1314 = vmul.f32 %v1297, %v1313
          %vm1315 = vcmp.eq.f32.partialorder %v1297, inf
          %v1316 = vsel %vm1315, %v1297, %v1314
          %vm1317 = vcmp.eq.f32.partialorder %v1297, 0.0
          %v1318 = vand.u32 %v1297, 2147483648
          %v1319 = vsel %vm1317, %v1318, %v1316
          %v1320 = vrsqrt.pop %v1298
          %v1321 = vmul.f32 %v1298, %v1320
          %vm1322 = vcmp.eq.f32.partialorder %v1298, inf
          %v1323 = vsel %vm1322, %v1298, %v1321
          %vm1324 = vcmp.eq.f32.partialorder %v1298, 0.0
          %v1325 = vand.u32 %v1298, 2147483648
          %v1326 = vsel %vm1324, %v1325, %v1323
          %v1327 = vrsqrt.pop %v1299
          %v1328 = vmul.f32 %v1299, %v1327
          %vm1329 = vcmp.eq.f32.partialorder %v1299, inf
          %v1330 = vsel %vm1329, %v1299, %v1328
          %vm1331 = vcmp.eq.f32.partialorder %v1299, 0.0
          %v1332 = vand.u32 %v1299, 2147483648
          %v1333 = vsel %vm1331, %v1332, %v1330
          %v1334 = vrsqrt.pop %v1300
          %v1335 = vmul.f32 %v1300, %v1334
          %vm1336 = vcmp.eq.f32.partialorder %v1300, inf
          %v1337 = vsel %vm1336, %v1300, %v1335
          %vm1338 = vcmp.eq.f32.partialorder %v1300, 0.0
          %v1339 = vand.u32 %v1300, 2147483648
          %v1340 = vsel %vm1338, %v1339, %v1337
          %v1341 = vrsqrt.pop %v1301
          %v1342 = vmul.f32 %v1301, %v1341
          %vm1343 = vcmp.eq.f32.partialorder %v1301, inf
          %v1344 = vsel %vm1343, %v1301, %v1342
          %vm1345 = vcmp.eq.f32.partialorder %v1301, 0.0
          %v1346 = vand.u32 %v1301, 2147483648
          %v1347 = vsel %vm1345, %v1346, %v1344
          %v1348 = vrsqrt.pop %v1302
          %v1349 = vmul.f32 %v1302, %v1348
          %vm1350 = vcmp.eq.f32.partialorder %v1302, inf
          %v1351 = vsel %vm1350, %v1302, %v1349
          %vm1352 = vcmp.eq.f32.partialorder %v1302, 0.0
          %v1353 = vand.u32 %v1302, 2147483648
          %v1354 = vsel %vm1352, %v1353, %v1351
          %v1355 = vrsqrt.pop %v1303
          %v1356 = vmul.f32 %v1303, %v1355
          %vm1357 = vcmp.eq.f32.partialorder %v1303, inf
          %v1358 = vsel %vm1357, %v1303, %v1356
          %vm1359 = vcmp.eq.f32.partialorder %v1303, 0.0
          %v1360 = vand.u32 %v1303, 2147483648
          %v1361 = vsel %vm1359, %v1360, %v1358
          %v1362 = vrsqrt.pop %v1304
          %v1363 = vmul.f32 %v1304, %v1362
          %vm1364 = vcmp.eq.f32.partialorder %v1304, inf
          %v1365 = vsel %vm1364, %v1304, %v1363
          %vm1366 = vcmp.eq.f32.partialorder %v1304, 0.0
          %v1367 = vand.u32 %v1304, 2147483648
          %v1368 = vsel %vm1366, %v1367, %v1365
          %v1369 = vrsqrt.pop %v1305
          %v1370 = vmul.f32 %v1305, %v1369
          %vm1371 = vcmp.eq.f32.partialorder %v1305, inf
          %v1372 = vsel %vm1371, %v1305, %v1370
          %vm1373 = vcmp.eq.f32.partialorder %v1305, 0.0
          %v1374 = vand.u32 %v1305, 2147483648
          %v1375 = vsel %vm1373, %v1374, %v1372
          %v1376 = vrsqrt.pop %v1306
          %v1377 = vmul.f32 %v1306, %v1376
          %vm1378 = vcmp.eq.f32.partialorder %v1306, inf
          %v1379 = vsel %vm1378, %v1306, %v1377
          %vm1380 = vcmp.eq.f32.partialorder %v1306, 0.0
          %v1381 = vand.u32 %v1306, 2147483648
          %v1382 = vsel %vm1380, %v1381, %v1379
          %v1383 = vrsqrt.pop %v1307
          %v1384 = vmul.f32 %v1307, %v1383
          %vm1385 = vcmp.eq.f32.partialorder %v1307, inf
          %v1386 = vsel %vm1385, %v1307, %v1384
          %vm1387 = vcmp.eq.f32.partialorder %v1307, 0.0
          %v1388 = vand.u32 %v1307, 2147483648
          %v1389 = vsel %vm1387, %v1388, %v1386
          %v1390 = vrsqrt.pop %v1308
          %v1391 = vmul.f32 %v1308, %v1390
          %vm1392 = vcmp.eq.f32.partialorder %v1308, inf
          %v1393 = vsel %vm1392, %v1308, %v1391
          %vm1394 = vcmp.eq.f32.partialorder %v1308, 0.0
          %v1395 = vand.u32 %v1308, 2147483648
          %v1396 = vsel %vm1394, %v1395, %v1393
          %v1397 = vrsqrt.pop %v1309
          %v1398 = vmul.f32 %v1309, %v1397
          %vm1399 = vcmp.eq.f32.partialorder %v1309, inf
          %v1400 = vsel %vm1399, %v1309, %v1398
          %vm1401 = vcmp.eq.f32.partialorder %v1309, 0.0
          %v1402 = vand.u32 %v1309, 2147483648
          %v1403 = vsel %vm1401, %v1402, %v1400
          %v1404 = vrsqrt.pop %v1310
          %v1405 = vmul.f32 %v1310, %v1404
          %vm1406 = vcmp.eq.f32.partialorder %v1310, inf
          %v1407 = vsel %vm1406, %v1310, %v1405
          %vm1408 = vcmp.eq.f32.partialorder %v1310, 0.0
          %v1409 = vand.u32 %v1310, 2147483648
          %v1410 = vsel %vm1408, %v1409, %v1407
          %v1411 = vrsqrt.pop %v1311
          %v1412 = vmul.f32 %v1311, %v1411
          %vm1413 = vcmp.eq.f32.partialorder %v1311, inf
          %v1414 = vsel %vm1413, %v1311, %v1412
          %vm1415 = vcmp.eq.f32.partialorder %v1311, 0.0
          %v1416 = vand.u32 %v1311, 2147483648
          %v1417 = vsel %vm1415, %v1416, %v1414
          %v1418 = vrsqrt.pop %v1312
          %v1419 = vmul.f32 %v1312, %v1418
          %vm1420 = vcmp.eq.f32.partialorder %v1312, inf
          %v1421 = vsel %vm1420, %v1312, %v1419
          %vm1422 = vcmp.eq.f32.partialorder %v1312, 0.0
          %v1423 = vand.u32 %v1312, 2147483648
          %v1424 = vsel %vm1422, %v1423, %v1421
          %v1425 = vmul.f32 %v1040, %v1024
          %v1426 = vmul.f32 %v1041, %v1025
          %v1427 = vmul.f32 %v1042, %v1026
          %v1428 = vmul.f32 %v1043, %v1027
          %v1429 = vmul.f32 %v1044, %v1028
          %v1430 = vmul.f32 %v1045, %v1029
          %v1431 = vmul.f32 %v1046, %v1030
          %v1432 = vmul.f32 %v1047, %v1031
          %v1433 = vmul.f32 %v1048, %v1032
          %v1434 = vmul.f32 %v1049, %v1033
          %v1435 = vmul.f32 %v1050, %v1034
          %v1436 = vmul.f32 %v1051, %v1035
          %v1437 = vmul.f32 %v1052, %v1036
          %v1438 = vmul.f32 %v1053, %v1037
          %v1439 = vmul.f32 %v1054, %v1038
          %v1440 = vmul.f32 %v1055, %v1039
          %v1441 = vsub.f32 %v848, %v1425
          %v1442 = vsub.f32 %v850, %v1426
          %v1443 = vsub.f32 %v852, %v1427
          %v1444 = vsub.f32 %v854, %v1428
          %v1445 = vsub.f32 %v856, %v1429
          %v1446 = vsub.f32 %v858, %v1430
          %v1447 = vsub.f32 %v860, %v1431
          %v1448 = vsub.f32 %v862, %v1432
          %v1449 = vsub.f32 %v864, %v1433
          %v1450 = vsub.f32 %v866, %v1434
          %v1451 = vsub.f32 %v868, %v1435
          %v1452 = vsub.f32 %v870, %v1436
          %v1453 = vsub.f32 %v872, %v1437
          %v1454 = vsub.f32 %v874, %v1438
          %v1455 = vsub.f32 %v876, %v1439
          %v1456 = vsub.f32 %v878, %v1440
          %v1457 = vmul.f32 %v1441, %v1007
          %v1458 = vmul.f32 %v1442, %v1007
          %v1459 = vmul.f32 %v1443, %v1007
          %v1460 = vmul.f32 %v1444, %v1007
          %v1461 = vmul.f32 %v1445, %v1007
          %v1462 = vmul.f32 %v1446, %v1007
          %v1463 = vmul.f32 %v1447, %v1007
          %v1464 = vmul.f32 %v1448, %v1007
          %v1465 = vmul.f32 %v1449, %v1007
          %v1466 = vmul.f32 %v1450, %v1007
          %v1467 = vmul.f32 %v1451, %v1007
          %v1468 = vmul.f32 %v1452, %v1007
          %v1469 = vmul.f32 %v1453, %v1007
          %v1470 = vmul.f32 %v1454, %v1007
          %v1471 = vmul.f32 %v1455, %v1007
          %v1472 = vmul.f32 %v1456, %v1007
          %v1473 = vadd.f32 %v1191, 1.1920929e-07
          %v1474 = vadd.f32 %v1198, 1.1920929e-07
          %v1475 = vadd.f32 %v1205, 1.1920929e-07
          %v1476 = vadd.f32 %v1212, 1.1920929e-07
          %v1477 = vadd.f32 %v1219, 1.1920929e-07
          %v1478 = vadd.f32 %v1226, 1.1920929e-07
          %v1479 = vadd.f32 %v1233, 1.1920929e-07
          %v1480 = vadd.f32 %v1240, 1.1920929e-07
          %v1481 = vadd.f32 %v1247, 1.1920929e-07
          %v1482 = vadd.f32 %v1254, 1.1920929e-07
          %v1483 = vadd.f32 %v1261, 1.1920929e-07
          %v1484 = vadd.f32 %v1268, 1.1920929e-07
          %v1485 = vadd.f32 %v1275, 1.1920929e-07
          %v1486 = vadd.f32 %v1282, 1.1920929e-07
          %v1487 = vadd.f32 %v1289, 1.1920929e-07
          %v1488 = vadd.f32 %v1296, 1.1920929e-07
          %v1489 = vadd.f32 %v1319, 1.1920929e-07
          %v1490 = vadd.f32 %v1326, 1.1920929e-07
          %v1491 = vadd.f32 %v1333, 1.1920929e-07
          %v1492 = vadd.f32 %v1340, 1.1920929e-07
          %v1493 = vadd.f32 %v1347, 1.1920929e-07
          %v1494 = vadd.f32 %v1354, 1.1920929e-07
          %v1495 = vadd.f32 %v1361, 1.1920929e-07
          %v1496 = vadd.f32 %v1368, 1.1920929e-07
          %v1497 = vadd.f32 %v1375, 1.1920929e-07
          %v1498 = vadd.f32 %v1382, 1.1920929e-07
          %v1499 = vadd.f32 %v1389, 1.1920929e-07
          %v1500 = vadd.f32 %v1396, 1.1920929e-07
          %v1501 = vadd.f32 %v1403, 1.1920929e-07
          %v1502 = vadd.f32 %v1410, 1.1920929e-07
          %v1503 = vadd.f32 %v1417, 1.1920929e-07
          %v1504 = vadd.f32 %v1424, 1.1920929e-07
          %v1505 = vmul.f32 %v1473, %v1489
          %v1506 = vmul.f32 %v1474, %v1490
          %v1507 = vmul.f32 %v1475, %v1491
          %v1508 = vmul.f32 %v1476, %v1492
          %v1509 = vmul.f32 %v1477, %v1493
          %v1510 = vmul.f32 %v1478, %v1494
          %v1511 = vmul.f32 %v1479, %v1495
          %v1512 = vmul.f32 %v1480, %v1496
          %v1513 = vmul.f32 %v1481, %v1497
          %v1514 = vmul.f32 %v1482, %v1498
          %v1515 = vmul.f32 %v1483, %v1499
          %v1516 = vmul.f32 %v1484, %v1500
          %v1517 = vmul.f32 %v1485, %v1501
          %v1518 = vmul.f32 %v1486, %v1502
          %v1519 = vmul.f32 %v1487, %v1503
          %v1520 = vmul.f32 %v1488, %v1504
          %v1521 = vrcp.pop %v1505
          %v1522 = vmul.f32 %v1457, %v1521
          %v1523 = vrcp.pop %v1506
          %v1524 = vmul.f32 %v1458, %v1523
          %v1525 = vrcp.pop %v1507
          %v1526 = vmul.f32 %v1459, %v1525
          %v1527 = vrcp.pop %v1508
          %v1528 = vmul.f32 %v1460, %v1527
          %v1529 = vrcp.pop %v1509
          %v1530 = vmul.f32 %v1461, %v1529
          %v1531 = vrcp.pop %v1510
          %v1532 = vmul.f32 %v1462, %v1531
          %v1533 = vrcp.pop %v1511
          %v1534 = vmul.f32 %v1463, %v1533
          %v1535 = vrcp.pop %v1512
          %v1536 = vmul.f32 %v1464, %v1535
          %v1537 = vrcp.pop %v1513
          %v1538 = vmul.f32 %v1465, %v1537
          %v1539 = vrcp.pop %v1514
          %v1540 = vmul.f32 %v1466, %v1539
          %v1541 = vrcp.pop %v1515
          %v1542 = vmul.f32 %v1467, %v1541
          %v1543 = vrcp.pop %v1516
          %v1544 = vmul.f32 %v1468, %v1543
          %v1545 = vrcp.pop %v1517
          %v1546 = vmul.f32 %v1469, %v1545
          %v1547 = vrcp.pop %v1518
          %v1548 = vmul.f32 %v1470, %v1547
          %v1549 = vrcp.pop %v1519
          %v1550 = vmul.f32 %v1471, %v1549
          %v1551 = vrcp.pop %v1520
          %v1552 = vmul.f32 %v1472, %v1551
          %v1553 = vsub.f32 1.0, %v1522
          %v1554 = vsub.f32 1.0, %v1524
          %v1555 = vsub.f32 1.0, %v1526
          %v1556 = vsub.f32 1.0, %v1528
          %v1557 = vsub.f32 1.0, %v1530
          %v1558 = vsub.f32 1.0, %v1532
          %v1559 = vsub.f32 1.0, %v1534
          %v1560 = vsub.f32 1.0, %v1536
          %v1561 = vsub.f32 1.0, %v1538
          %v1562 = vsub.f32 1.0, %v1540
          %v1563 = vsub.f32 1.0, %v1542
          %v1564 = vsub.f32 1.0, %v1544
          %v1565 = vsub.f32 1.0, %v1546
          %v1566 = vsub.f32 1.0, %v1548
          %v1567 = vsub.f32 1.0, %v1550
          %v1568 = vsub.f32 1.0, %v1552
          %v1569 = vmul.f32 %v1553, 1000.0
          %v1570 = vmul.f32 %v1554, 1000.0
          %v1571 = vmul.f32 %v1555, 1000.0
          %v1572 = vmul.f32 %v1556, 1000.0
          %v1573 = vmul.f32 %v1557, 1000.0
          %v1574 = vmul.f32 %v1558, 1000.0
          %v1575 = vmul.f32 %v1559, 1000.0
          %v1576 = vmul.f32 %v1560, 1000.0
          %v1577 = vmul.f32 %v1561, 1000.0
          %v1578 = vmul.f32 %v1562, 1000.0
          %v1579 = vmul.f32 %v1563, 1000.0
          %v1580 = vmul.f32 %v1564, 1000.0
          %v1581 = vmul.f32 %v1565, 1000.0
          %v1582 = vmul.f32 %v1566, 1000.0
          %v1583 = vmul.f32 %v1567, 1000.0
          %v1584 = vmul.f32 %v1568, 1000.0
          %v1585 = vadd.f32 %v991, %v1569
          %v1586 = vadd.f32 %v992, %v1570
          %v1587 = vadd.f32 %v993, %v1571
          %v1588 = vadd.f32 %v994, %v1572
          %v1589 = vadd.f32 %v995, %v1573
          %v1590 = vadd.f32 %v996, %v1574
          %v1591 = vadd.f32 %v997, %v1575
          %v1592 = vadd.f32 %v998, %v1576
          %v1593 = vadd.f32 %v999, %v1577
          %v1594 = vadd.f32 %v1000, %v1578
          %v1595 = vadd.f32 %v1001, %v1579
          %v1596 = vadd.f32 %v1002, %v1580
          %v1597 = vadd.f32 %v1003, %v1581
          %v1598 = vadd.f32 %v1004, %v1582
          %v1599 = vadd.f32 %v1005, %v1583
          %v1600 = vadd.f32 %v1006, %v1584
          %vm1601 = vcmask 7168
          %1602 = vst.msk [vmem:[%s294] sm:$0xff] %vm1601, %v1585
          %1603 = vst.msk [vmem:[%s294 + $0x8] sm:$0xff] %vm1601, %v1586
          %1604 = vst.msk [vmem:[%s294 + $0x10] sm:$0xff] %vm1601, %v1587
          %1605 = vst.msk [vmem:[%s294 + $0x18] sm:$0xff] %vm1601, %v1588
          %1606 = vst.msk [vmem:[%s294 + $0x20] sm:$0xff] %vm1601, %v1589
          %1607 = vst.msk [vmem:[%s294 + $0x28] sm:$0xff] %vm1601, %v1590
          %1608 = vst.msk [vmem:[%s294 + $0x30] sm:$0xff] %vm1601, %v1591
          %1609 = vst.msk [vmem:[%s294 + $0x38] sm:$0xff] %vm1601, %v1592
          %1610 = vst.msk [vmem:[%s294 + $0x40] sm:$0xff] %vm1601, %v1593
          %1611 = vst.msk [vmem:[%s294 + $0x48] sm:$0xff] %vm1601, %v1594
          %1612 = vst.msk [vmem:[%s294 + $0x50] sm:$0xff] %vm1601, %v1595
          %1613 = vst.msk [vmem:[%s294 + $0x58] sm:$0xff] %vm1601, %v1596
          %1614 = vst.msk [vmem:[%s294 + $0x60] sm:$0xff] %vm1601, %v1597
          %1615 = vst.msk [vmem:[%s294 + $0x68] sm:$0xff] %vm1601, %v1598
          %1616 = vst.msk [vmem:[%s294 + $0x70] sm:$0xff] %vm1601, %v1599
          %1617 = vst.msk [vmem:[%s294 + $0x78] sm:$0xff] %vm1601, %v1600
        $region51: #{tpu_custom_call.1} parent=27 // pred_fallthru
          _
        %s1618 = smul.u32 16, %s24
        %p1619 = scmp.lt.s32.totalorder %s1618, 31
        %s1620 = scalar_select %p1619, %s1618, 31
        %s1621 = smul.addr %s1620, 8
        %s1622 = scalar_lea.vmem %s2, %s1621
        // Predicated region
        $region52: #{tpu_custom_call.1} parent=27 // pred_check
          %p1623 = pneg %p116
        $region53: #{tpu_custom_call.1} parent=27 // pred_check_branch
          %1625 = sbr.rel (%p1623) target = $region55
        $region54: #{tpu_custom_call.1} parent=27 // pred_region
          %s1626 = smul.u32 16, %s24
        $region55: #{tpu_custom_call.1} parent=27 // pred_fallthru
          _
      $region28: #{tpu_custom_call.1} parent=5 // pred_fallthru
        _
      %p1627 = scmp.le.s32.totalorder 2, %s14
      // Predicated region
      $region56: #{tpu_custom_call.1} parent=5 // pred_check
        %p1628 = pneg %p1627
      $region57: #{tpu_custom_call.1} parent=5 // pred_check_branch
        %1630 = sbr.rel (%p1628) target = $region59
      $region58: #{tpu_custom_call.1} parent=5 // pred_region
        %s1631 = ssub.s32 %s14, 2
        // Predicated region
        $region60: #{tpu_custom_call.1} parent=58 // pred_check
          %p1632 = pneg %p122
        $region61: #{tpu_custom_call.1} parent=58 // pred_check_branch
          %1634 = sbr.rel (%p1632) target = $region63
        $region62: #{tpu_custom_call.1} parent=58 // pred_region
          %s1635 = smul.u32 16, %s27
          %p1636 = scmp.lt.s32.totalorder %s1635, 31
          %s1637 = scalar_select %p1636, %s1635, 31
          %s1638 = smul.addr %s1637, 8
          %s1639 = scalar_lea.vmem %s2, %s1638
        $region63: #{tpu_custom_call.1} parent=58 // pred_fallthru
          _
      $region59: #{tpu_custom_call.1} parent=5 // pred_fallthru
        _
    $region6: #{tpu_custom_call.1} parent=1 // loop_footer
      %s18 = sadd.s32 1, %s14
    $region7: #{tpu_custom_call.1} parent=1 // loop_footer_branch
      %13 = sbr.rel target = $region3
    $region8: #{tpu_custom_call.1} parent=1 // loop_exit
      _
    %1640 = vsyncpa [#allocation11], 1
    %s1641 = scalar_lea.sflag [#allocation11], 1
    %1642 = vsyncpa %s1641, 1
    %1643 = vsyncpa [#allocation13], 1
    %s1644 = scalar_lea.sflag [#allocation13], 1
    %1645 = vsyncpa %s1644, 1

</llo_original>
